<compile_context>
chip_gen: v7x
topology: tpu7x:2x2x1
jax: 0.10.0
libtpu: 0.0.40
codegen_flags: <defaults>
</compile_context>

<pallas_src>
import jax
import jax.numpy as jnp
from jax.experimental import pallas as pl
from jax.experimental.pallas import tpu as pltpu


def _round_up(x, m):
    return ((x + m - 1) // m) * m


def _vmem_budget_bytes():
    """~75% of physical VMEM per TensorCore (headroom for Mosaic scratch)."""
    try:
        info = pltpu.get_tpu_info()
        cap = int(getattr(info, "vmem_capacity_bytes", 64 << 20))
    except Exception:
        cap = 64 << 20  # conservative (v7x per-TC VMEM)
    return cap * 3 // 4


def mf_dib_kernel(idx_ref, table_ref, out_ref):
    """One batch tile; batch on lanes, features on sublanes.

    idx_ref   : (2, TB) int32   row 0 = user id, row 1 = item id + num_users
    table_ref : (4k, NU+NI) f32 block-diagonal fused table, row blocks
                [W^T ; H^T ; W_r^T ; H_r^T]   (resident in VMEM, single copy)
    out_ref   : (2k+8, TB) f32 fused output slab:
        rows [0, k)   U_emb^T
        rows [k, 2k)  V_emb^T
        row  2k       out     = sum(U_emb * V_emb)
        row  2k+1     out_r   = sum(U_r  * V_r )
        row  2k+2     out_all = out + out_r
        rows 2k+3..   zero padding (keeps the single store sublane-aligned)
    """
    four_k, n_rows = table_ref.shape
    k = four_k // 4
    tb = idx_ref.shape[1]
    f32 = jnp.float32

    u = idx_ref[0:1, :]            # (1, TB) user row ids
    v = idx_ref[1:2, :]            # (1, TB) item row ids (pre-offset by NU)

    # Combined transposed one-hot: table rows on sublanes, batch on lanes.
    # Two ones per column; the block-diagonal table zeros the cross terms, so
    # the gather matmul is an exact row select.
    rows = jax.lax.broadcasted_iota(jnp.int32, (n_rows, tb), 0)
    onehot = jnp.logical_or(rows == u, rows == v).astype(f32)    # (NU+NI, TB)

    # Single MXU gather: (4k, NU+NI) @ (NU+NI, TB) -> rows [U; V; U_r; V_r].
    gathered = jnp.dot(table_ref[...], onehot,
                       preferred_element_type=f32,
                       precision=jax.lax.Precision.HIGHEST)      # (4k, TB)

    # Pair-swap permutation (U<->V, U_r<->V_r) as a tiny MXU matmul instead of
    # a sublane repack: partner rows are [V; U; V_r; U_r].
    ri = jax.lax.broadcasted_iota(jnp.int32, (four_k, four_k), 0)
    ci = jax.lax.broadcasted_iota(jnp.int32, (four_k, four_k), 1)
    same_half = (ri < 2 * k) == (ci < 2 * k)
    swap = jnp.logical_and(jnp.abs(ri - ci) == k, same_half).astype(f32)
    partner = jnp.dot(swap, gathered, preferred_element_type=f32,
                      precision=jax.lax.Precision.HIGHEST)       # (4k, TB)

    prod = gathered * partner                                    # (4k, TB)
    # prod rows [0,k) = U*V ; rows [2k,3k) = U_r*V_r (other rows: duplicates).

    # Row-sum reductions as an (8, 4k) 0/1 selector matmul (rides the MXU
    # slot, keeps the sums block sublane-aligned): rows = out, out_r, out_all,
    # then zero padding.
    sr = jax.lax.broadcasted_iota(jnp.int32, (8, four_k), 0)
    sc = jax.lax.broadcasted_iota(jnp.int32, (8, four_k), 1)
    in_uv = sc < k
    in_r = jnp.logical_and(sc >= 2 * k, sc < 3 * k)
    sel = (jnp.logical_and(sr == 0, in_uv)
           | jnp.logical_and(sr == 1, in_r)
           | jnp.logical_and(sr == 2, jnp.logical_or(in_uv, in_r))
           ).astype(f32)
    sums = jnp.dot(sel, prod, preferred_element_type=f32,
                   precision=jax.lax.Precision.HIGHEST)          # (8, TB)

    # One fused, lane/sublane-dense writeback for the whole tile.
    out_ref[...] = jnp.concatenate([gathered[: 2 * k, :], sums], axis=0)


class MF_DIB_Pallas:
    """JAX/Pallas re-implementation of the MF_DIB forward pass."""

    def __init__(self, num_users, num_items, embedding_k=4, key=None,
                 batch_tile=2048):
        self.num_users = num_users
        self.num_items = num_items
        self.embedding_k = embedding_k
        self._tb_max = _round_up(max(128, batch_tile), 128)
        if key is None:
            key = jax.random.PRNGKey(0)
        k1, k2, k3, k4 = jax.random.split(key, 4)
        # nn.Embedding default init ~ N(0, 1).
        self.W = jax.random.normal(k1, (num_users, embedding_k), jnp.float32)
        self.H = jax.random.normal(k2, (num_items, embedding_k), jnp.float32)
        self.W_r = jax.random.normal(k3, (num_users, embedding_k), jnp.float32)
        self.H_r = jax.random.normal(k4, (num_items, embedding_k), jnp.float32)

    def _fused_table(self):
        """Block-diagonal (4k, NU+NI) table, row blocks [W^T;H^T;W_r^T;H_r^T]."""
        zu = jnp.zeros((self.embedding_k, self.num_users), jnp.float32)
        zi = jnp.zeros((self.embedding_k, self.num_items), jnp.float32)
        return jnp.concatenate([
            jnp.concatenate([self.W.T, zi], axis=1),
            jnp.concatenate([zu, self.H.T], axis=1),
            jnp.concatenate([self.W_r.T, zi], axis=1),
            jnp.concatenate([zu, self.H_r.T], axis=1),
        ], axis=0)

    def forward(self, x, is_training=False):
        # x: (B, 2) integer array of [user_idx, item_idx] pairs.
        B = x.shape[0]
        k = self.embedding_k
        nu, ni = self.num_users, self.num_items
        slab_rows = 2 * k + 8

        # Clamp like jnp.take's clip mode; item ids offset by NU so the kernel
        # builds one combined one-hot against the fused block-diagonal table.
        u = jnp.clip(x[:, 0].astype(jnp.int32), 0, nu - 1)
        v = jnp.clip(x[:, 1].astype(jnp.int32), 0, ni - 1) + nu

        vmem_budget = _vmem_budget_bytes()

        # Batch tiling: TB a multiple of 128 (full lanes); prefer >= 2 tiles
        # for large B so the "parallel" axis can use v7x's 2nd TensorCore.
        tb = min(self._tb_max, _round_up(B, 128))
        if B > 128 and _round_up(B, tb) // tb < 2:
            tb = _round_up((B + 1) // 2, 128)

        def vmem_estimate(tb_):
            return 4 * (
                4 * k * (nu + ni)          # resident fused table (single copy)
                + (nu + ni) * tb_          # one-hot
                + 4 * 4 * k * tb_          # gathered / partner / prod / slab
                + 2 * 2 * tb_              # double-buffered fused indices
                + 2 * slab_rows * tb_      # double-buffered output slab
            )

        while tb > 128 and 2 * vmem_estimate(tb) > vmem_budget:
            tb = max(128, _round_up(tb // 2, 128))

        bp = _round_up(B, tb)
        pad = bp - B
        # Padded tail entries gather valid rows (user 0 / item 0), compute
        # garbage and are sliced off below -- intentional.
        idx = jnp.stack([jnp.pad(u, (0, pad)), jnp.pad(v, (0, pad))], axis=0)

        table = self._fused_table()
        vmem_limit = int(min(max(2 * vmem_estimate(tb), 8 << 20), vmem_budget))

        slab = pl.pallas_call(
            mf_dib_kernel,
            out_shape=jax.ShapeDtypeStruct((slab_rows, bp), jnp.float32),
            grid=(bp // tb,),
            in_specs=[
                pl.BlockSpec((2, tb), lambda b: (0, b)),        # fused ids
                # Whole fused table resident in VMEM once: no per-step DMA,
                # no double buffering.
                pl.BlockSpec(memory_space=pltpu.MemorySpace.VMEM),
            ],
            out_specs=pl.BlockSpec((slab_rows, tb), lambda b: (0, b)),
            compiler_params=pltpu.CompilerParams(
                dimension_semantics=("parallel",),
                vmem_limit_bytes=vmem_limit,
            ),
        )(idx, table)

        U_emb = slab[:k, :B].T                                   # (B, k)
        V_emb = slab[k:2 * k, :B].T                              # (B, k)
        out = slab[2 * k, :B]                                    # (B,)
        out_r = slab[2 * k + 1, :B]                              # (B,)
        out_all = slab[2 * k + 2, :B]                            # (B,)

        if is_training:
            return out, out_r, out_all, U_emb, V_emb
        return out


def _reference_forward(model, x):
    """Pure-JAX reference for a correctness check."""
    u = jnp.clip(x[:, 0].astype(jnp.int32), 0, model.num_users - 1)
    v = jnp.clip(x[:, 1].astype(jnp.int32), 0, model.num_items - 1)
    U = jnp.take(model.W, u, axis=0)
    V = jnp.take(model.H, v, axis=0)
    Ur = jnp.take(model.W_r, u, axis=0)
    Vr = jnp.take(model.H_r, v, axis=0)
    out = jnp.sum(U * V, axis=1)
    out_r = jnp.sum(Ur * Vr, axis=1)
    out_all = jnp.sum(jnp.concatenate([U, Ur], axis=-1)
                      * jnp.concatenate([V, Vr], axis=-1), axis=1)
    return out, out_r, out_all, U, V


if __name__ == "__main__":
    num_users, num_items, embedding_k, batch = 32, 64, 4, 8

    key = jax.random.PRNGKey(0)
    k_model, k_u, k_i = jax.random.split(key, 3)
    model = MF_DIB_Pallas(num_users, num_items, embedding_k, key=k_model)

    user_ids = jax.random.randint(k_u, (batch,), 0, num_users, jnp.int32)
    item_ids = jax.random.randint(k_i, (batch,), 0, num_items, jnp.int32)
    x = jnp.stack([user_ids, item_ids], axis=1)              # (B, 2) int32

    # Inference path (is_training=False): returns just `out`.
    out = model.forward(x)
    # Training path: full tuple (out, out_r, out_all, U_emb, V_emb).
    out_t, out_r, out_all, U_emb, V_emb = model.forward(x, is_training=True)
    jax.block_until_ready((out, out_t, out_r, out_all, U_emb, V_emb))

    r_out, r_out_r, r_out_all, r_U, r_V = _reference_forward(model, x)
    assert jnp.allclose(out, r_out, atol=1e-5)
    assert jnp.allclose(out_t, r_out, atol=1e-5)
    assert jnp.allclose(out_r, r_out_r, atol=1e-5)
    assert jnp.allclose(out_all, r_out_all, atol=1e-5)
    assert jnp.allclose(U_emb, r_U, atol=1e-5)
    assert jnp.allclose(V_emb, r_V, atol=1e-5)

    print("KERNEL_OK")
</pallas_src>

<mosaic_0001>
module attributes {stable_mosaic.version = 11 : i64} {
  func.func @mf_dib_kernel(%arg0: i32, %arg1: memref<2x128xi32, #tpu.memory_space<vmem>>, %arg2: memref<16x96xf32, #tpu.memory_space<vmem>>, %arg3: memref<16x128xf32, #tpu.memory_space<vmem>>) attributes {dimension_semantics = [#tpu.dimension_semantics<parallel>], iteration_bounds = array<i64: 1>, scalar_prefetch = 0 : i64, scratch_operands = 0 : i64, tpu.core_type = #tpu.core_type<tc>, window_params = [{transform_indices = @transform_0, window_bounds = array<i64: 2, 128>}, {pipeline_mode = #tpu.pipeline_mode<synchronous>, transform_indices = @transform_1, window_bounds = array<i64: 16, 96>}, {transform_indices = @transform_2, window_bounds = array<i64: 16, 128>}]} {
    %c0 = arith.constant 0 : index
    %c0_0 = arith.constant 0 : index
    %0 = vector.load %arg1[%c0, %c0_0] : memref<2x128xi32, #tpu.memory_space<vmem>>, vector<1x128xi32>
    %c1 = arith.constant 1 : index
    %c0_1 = arith.constant 0 : index
    %1 = vector.load %arg1[%c1, %c0_1] : memref<2x128xi32, #tpu.memory_space<vmem>>, vector<1x128xi32>
    %2 = tpu.iota {dimensions = array<i32: 0>} : vector<96x128xi32>
    %3 = vector.broadcast %0 : vector<1x128xi32> to vector<96x128xi32>
    %4 = arith.cmpi eq, %2, %3 : vector<96x128xi32>
    %5 = vector.broadcast %1 : vector<1x128xi32> to vector<96x128xi32>
    %6 = arith.cmpi eq, %2, %5 : vector<96x128xi32>
    %7 = arith.ori %4, %6 : vector<96x128xi1>
    %8 = arith.extui %7 : vector<96x128xi1> to vector<96x128xi32>
    %9 = arith.sitofp %8 : vector<96x128xi32> to vector<96x128xf32>
    %c0_2 = arith.constant 0 : index
    %c0_3 = arith.constant 0 : index
    %10 = vector.load %arg2[%c0_2, %c0_3] : memref<16x96xf32, #tpu.memory_space<vmem>>, vector<16x96xf32>
    %cst = arith.constant dense<0.000000e+00> : vector<16x128xf32>
    %11 = tpu.matmul %10, %9, %cst {dimension_numbers = #tpu.dot_dimension_numbers<[1], [0], [0], [1], [0, 0, 1, 1], [], []>, precision = #tpu.contract_precision<fp32>} : vector<16x96xf32>, vector<96x128xf32>, vector<16x128xf32> -> vector<16x128xf32>
    %12 = tpu.iota {dimensions = array<i32: 0>} : vector<16x16xi32>
    %13 = tpu.iota {dimensions = array<i32: 1>} : vector<16x16xi32>
    %c8_i32 = arith.constant 8 : i32
    %14 = vector.broadcast %c8_i32 : i32 to vector<16x16xi32>
    %15 = arith.cmpi slt, %12, %14 : vector<16x16xi32>
    %c8_i32_4 = arith.constant 8 : i32
    %16 = vector.broadcast %c8_i32_4 : i32 to vector<16x16xi32>
    %17 = arith.cmpi slt, %13, %16 : vector<16x16xi32>
    %18 = arith.xori %15, %17 : vector<16x16xi1>
    %cst_5 = arith.constant dense<true> : vector<16x16xi1>
    %19 = arith.xori %18, %cst_5 : vector<16x16xi1>
    %20 = arith.subi %12, %13 : vector<16x16xi32>
    %21 = math.absi %20 : vector<16x16xi32>
    %c4_i32 = arith.constant 4 : i32
    %22 = vector.broadcast %c4_i32 : i32 to vector<16x16xi32>
    %23 = arith.cmpi eq, %21, %22 : vector<16x16xi32>
    %24 = arith.andi %23, %19 : vector<16x16xi1>
    %25 = arith.extui %24 : vector<16x16xi1> to vector<16x16xi32>
    %26 = arith.sitofp %25 : vector<16x16xi32> to vector<16x16xf32>
    %cst_6 = arith.constant dense<0.000000e+00> : vector<16x128xf32>
    %27 = tpu.matmul %26, %11, %cst_6 {dimension_numbers = #tpu.dot_dimension_numbers<[1], [0], [0], [1], [0, 0, 1, 1], [], []>, precision = #tpu.contract_precision<fp32>} : vector<16x16xf32>, vector<16x128xf32>, vector<16x128xf32> -> vector<16x128xf32>
    %28 = arith.mulf %11, %27 : vector<16x128xf32>
    %29 = tpu.iota {dimensions = array<i32: 0>} : vector<8x16xi32>
    %30 = tpu.iota {dimensions = array<i32: 1>} : vector<8x16xi32>
    %c4_i32_7 = arith.constant 4 : i32
    %31 = vector.broadcast %c4_i32_7 : i32 to vector<8x16xi32>
    %32 = arith.cmpi slt, %30, %31 : vector<8x16xi32>
    %c8_i32_8 = arith.constant 8 : i32
    %33 = vector.broadcast %c8_i32_8 : i32 to vector<8x16xi32>
    %34 = arith.cmpi sge, %30, %33 : vector<8x16xi32>
    %c12_i32 = arith.constant 12 : i32
    %35 = vector.broadcast %c12_i32 : i32 to vector<8x16xi32>
    %36 = arith.cmpi slt, %30, %35 : vector<8x16xi32>
    %37 = arith.andi %34, %36 : vector<8x16xi1>
    %c0_i32 = arith.constant 0 : i32
    %38 = vector.broadcast %c0_i32 : i32 to vector<8x16xi32>
    %39 = arith.cmpi eq, %29, %38 : vector<8x16xi32>
    %40 = arith.andi %39, %32 : vector<8x16xi1>
    %c1_i32 = arith.constant 1 : i32
    %41 = vector.broadcast %c1_i32 : i32 to vector<8x16xi32>
    %42 = arith.cmpi eq, %29, %41 : vector<8x16xi32>
    %43 = arith.andi %42, %37 : vector<8x16xi1>
    %44 = arith.ori %40, %43 : vector<8x16xi1>
    %c2_i32 = arith.constant 2 : i32
    %45 = vector.broadcast %c2_i32 : i32 to vector<8x16xi32>
    %46 = arith.cmpi eq, %29, %45 : vector<8x16xi32>
    %47 = arith.ori %32, %37 : vector<8x16xi1>
    %48 = arith.andi %46, %47 : vector<8x16xi1>
    %49 = arith.ori %44, %48 : vector<8x16xi1>
    %50 = arith.extui %49 : vector<8x16xi1> to vector<8x16xi32>
    %51 = arith.sitofp %50 : vector<8x16xi32> to vector<8x16xf32>
    %cst_9 = arith.constant dense<0.000000e+00> : vector<8x128xf32>
    %52 = tpu.matmul %51, %28, %cst_9 {dimension_numbers = #tpu.dot_dimension_numbers<[1], [0], [0], [1], [0, 0, 1, 1], [], []>, precision = #tpu.contract_precision<fp32>} : vector<8x16xf32>, vector<16x128xf32>, vector<8x128xf32> -> vector<8x128xf32>
    %53 = vector.extract_strided_slice %11 {offsets = [0, 0], sizes = [8, 128], strides = [1, 1]} : vector<16x128xf32> to vector<8x128xf32>
    %54 = tpu.concatenate %53, %52 in 0 : vector<8x128xf32>, vector<8x128xf32> -> vector<16x128xf32>
    %c0_10 = arith.constant 0 : index
    %c0_11 = arith.constant 0 : index
    %55 = vector.load %arg3[%c0_10, %c0_11] : memref<16x128xf32, #tpu.memory_space<vmem>>, vector<16x128xf32>
    tpu.vector_store %arg3[%c0_10, %c0_11], %54 {strides = array<i32>} : memref<16x128xf32, #tpu.memory_space<vmem>>, vector<16x128xf32>,
    return
  }
  func.func @transform_0(%arg0: i32) -> (i32, i32) {
    %c0_i32 = arith.constant 0 : i32
    %c0_i32_0 = arith.constant 0 : i32
    return %c0_i32, %arg0 : i32, i32
  }
  func.func @transform_1(%arg0: i32) -> (i32, i32) {
    %c0_i32 = arith.constant 0 : i32
    %c0_i32_0 = arith.constant 0 : i32
    %c0_i32_1 = arith.constant 0 : i32
    return %c0_i32, %c0_i32_0 : i32, i32
  }
  func.func @transform_2(%arg0: i32) -> (i32, i32) {
    %c0_i32 = arith.constant 0 : i32
    %c0_i32_0 = arith.constant 0 : i32
    return %c0_i32, %arg0 : i32, i32
  }
}

</mosaic_0001>

<llo_original>
// kernel: tpu_custom_call.1
$region0: #{tpu_custom_call.1}
  #allocation0 [shape = 'u32[]', space=smem, size = 0x4, offset = 0x4, fixed_abs, tag = 'smem constant byte address 0x4 - core index']
  #allocation1 [shape = 'u32[144,128]{1,0:T(1,128)}', space=vmem, size = 0x12000, scoped, tag = 'internal scratch']
  %s0 = inlined_call_operand.hbm [shape: s32[2,128], index: 0, kind: input, shape index: {}]
  %s1 = inlined_call_operand.hbm [shape: f32[16,96], index: 1, kind: input, shape index: {}]
  %s2 = inlined_call_operand.hbm [shape: f32[16,128], index: 2, kind: output, shape index: {}]
  %s3 = sld [smem:[#allocation0]]
  $region26: #{tpu_custom_call.1} parent=0
    _
  %s5 = ssub.s32 1, %s3
  %s6 = scalar_select 0, %s5, %s3
  $region1: #{tpu_custom_call.1} parent=0
    #allocation2 [shape = 'u8[1024]{0}', space=vmem, size = 0x400, scoped, tag = 'input window, operand 0, single buffered']
    #allocation3 [shape = 's32[1]{0}', space=sflag, size = 0x4, scoped, tag = 'scoped memory for tpu_custom_call.1']
    #allocation4 [shape = 's32[1]{0}', space=sflag, size = 0x4, scoped, tag = 'scoped memory for tpu_custom_call.1']
    #allocation5 [shape = 'u8[8192]{0}', space=vmem, size = 0x2000, scoped, tag = 'input window, operand 1, single buffered']
    #allocation6 [shape = 's32[1]{0}', space=sflag, size = 0x4, scoped, tag = 'scoped memory for tpu_custom_call.1']
    #allocation7 [shape = 'u8[8192]{0}', space=vmem, size = 0x2000, scoped, tag = 'output window, operand 0, single buffered']
    %7 = vsyncpa [#allocation3], 0
    %8 = vsyncpa [#allocation6], 0
    %9 = vsyncpa [#allocation4], 0
    // Predicated region
    $region2: #{tpu_custom_call.1} parent=1 // pred_check
      _
    $region3: #{tpu_custom_call.1} parent=1 // pred_check_branch
      %11 = sbr.rel (0) target = $region5
    $region4: #{tpu_custom_call.1} parent=1 // pred_region
      %s13 = ssub.s32 32, 32
      %14 = vsyncadd [#allocation3], %s13
      %s16 = sshll.u32 [#allocation2], 4
      %s17 = int_to_ptr.vmem [resolvable:$true] %s16
      %19 = dma.hbm_to_vmem [thread:$0]  %s0, 32, %s17, [#allocation3]
    $region5: #{tpu_custom_call.1} parent=1 // pred_fallthru
      _
    // Predicated region
    $region6: #{tpu_custom_call.1} parent=1 // pred_check
      _
    $region7: #{tpu_custom_call.1} parent=1 // pred_check_branch
      %21 = sbr.rel (0) target = $region9
    $region8: #{tpu_custom_call.1} parent=1 // pred_region
      %s23 = ssub.s32 256, 256
      %24 = vsyncadd [#allocation6], %s23
      %s25 = sshll.u32 [#allocation5], 4
      %s26 = int_to_ptr.vmem [resolvable:$true] %s25
      %31 = dma.hbm_to_vmem [thread:$0]  %s1, 256, %s26, [#allocation6], 128, 128, 8
    $region9: #{tpu_custom_call.1} parent=1 // pred_fallthru
      _
    // Predicated region
    $region10: #{tpu_custom_call.1} parent=1 // pred_check
      _
    $region11: #{tpu_custom_call.1} parent=1 // pred_check_branch
      %33 = sbr.rel (0) target = $region13
    $region12: #{tpu_custom_call.1} parent=1 // pred_region
      %34 = dma.done [#allocation3], 32
    $region13: #{tpu_custom_call.1} parent=1 // pred_fallthru
      _
    // Predicated region
    $region14: #{tpu_custom_call.1} parent=1 // pred_check
      _
    $region15: #{tpu_custom_call.1} parent=1 // pred_check_branch
      %36 = sbr.rel (0) target = $region17
    $region16: #{tpu_custom_call.1} parent=1 // pred_region
      %37 = dma.done [#allocation6], 256
    $region17: #{tpu_custom_call.1} parent=1 // pred_fallthru
      _
    %v38 = vld [vmem:[#allocation2] sm:$0x1]
    %v39 = vld [vmem:[#allocation2 + $0x1] sm:$0x1]
    %v40 = vlaneseq
    %v41 = vshrl.u32 %v40, 7
    %v42 = vadd.s32 %v41, 8
    %v43 = vadd.s32 %v41, 16
    %v44 = vadd.s32 %v41, 24
    %v45 = vadd.s32 %v41, 32
    %v46 = vadd.s32 %v41, 40
    %v47 = vadd.s32 %v41, 48
    %v48 = vadd.s32 %v41, 56
    %v49 = vadd.s32 %v41, 64
    %v50 = vadd.s32 %v41, 72
    %v51 = vadd.s32 %v41, 80
    %v52 = vadd.s32 %v41, 88
    %v53 = vlaneseq
    %v54 = vshrl.u32 %v53, 7
    %v55 = vsub.s32 0, %v54
    %v56 = vrot.slane %v38, %v55
    %vm57 = vcmp.eq.s32.totalorder %v41, %v56
    %vm58 = vcmp.eq.s32.totalorder %v42, %v56
    %vm59 = vcmp.eq.s32.totalorder %v43, %v56
    %vm60 = vcmp.eq.s32.totalorder %v44, %v56
    %vm61 = vcmp.eq.s32.totalorder %v45, %v56
    %vm62 = vcmp.eq.s32.totalorder %v46, %v56
    %vm63 = vcmp.eq.s32.totalorder %v47, %v56
    %vm64 = vcmp.eq.s32.totalorder %v48, %v56
    %vm65 = vcmp.eq.s32.totalorder %v49, %v56
    %vm66 = vcmp.eq.s32.totalorder %v50, %v56
    %vm67 = vcmp.eq.s32.totalorder %v51, %v56
    %vm68 = vcmp.eq.s32.totalorder %v52, %v56
    %v69 = vlaneseq
    %v70 = vshrl.u32 %v69, 7
    %v71 = vsub.s32 0, %v70
    %v72 = vrot.slane %v39, %v71
    %vm73 = vcmp.eq.s32.totalorder %v41, %v72
    %vm74 = vcmp.eq.s32.totalorder %v42, %v72
    %vm75 = vcmp.eq.s32.totalorder %v43, %v72
    %vm76 = vcmp.eq.s32.totalorder %v44, %v72
    %vm77 = vcmp.eq.s32.totalorder %v45, %v72
    %vm78 = vcmp.eq.s32.totalorder %v46, %v72
    %vm79 = vcmp.eq.s32.totalorder %v47, %v72
    %vm80 = vcmp.eq.s32.totalorder %v48, %v72
    %vm81 = vcmp.eq.s32.totalorder %v49, %v72
    %vm82 = vcmp.eq.s32.totalorder %v50, %v72
    %vm83 = vcmp.eq.s32.totalorder %v51, %v72
    %vm84 = vcmp.eq.s32.totalorder %v52, %v72
    %vm85 = vmor %vm57, %vm73
    %vm86 = vmor %vm58, %vm74
    %vm87 = vmor %vm59, %vm75
    %vm88 = vmor %vm60, %vm76
    %vm89 = vmor %vm61, %vm77
    %vm90 = vmor %vm62, %vm78
    %vm91 = vmor %vm63, %vm79
    %vm92 = vmor %vm64, %vm80
    %vm93 = vmor %vm65, %vm81
    %vm94 = vmor %vm66, %vm82
    %vm95 = vmor %vm67, %vm83
    %vm96 = vmor %vm68, %vm84
    %v97 = vsel %vm85, 1, 0
    %v98 = vsel %vm86, 1, 0
    %v99 = vsel %vm87, 1, 0
    %v100 = vsel %vm88, 1, 0
    %v101 = vsel %vm89, 1, 0
    %v102 = vsel %vm90, 1, 0
    %v103 = vsel %vm91, 1, 0
    %v104 = vsel %vm92, 1, 0
    %v105 = vsel %vm93, 1, 0
    %v106 = vsel %vm94, 1, 0
    %v107 = vsel %vm95, 1, 0
    %v108 = vsel %vm96, 1, 0
    %v109 = vcvt.s32.f32 %v97
    %v110 = vcvt.s32.f32 %v98
    %v111 = vcvt.s32.f32 %v99
    %v112 = vcvt.s32.f32 %v100
    %v113 = vcvt.s32.f32 %v101
    %v114 = vcvt.s32.f32 %v102
    %v115 = vcvt.s32.f32 %v103
    %v116 = vcvt.s32.f32 %v104
    %v117 = vcvt.s32.f32 %v105
    %v118 = vcvt.s32.f32 %v106
    %v119 = vcvt.s32.f32 %v107
    %v120 = vcvt.s32.f32 %v108
    %v121 = vld [vmem:[#allocation5] sm:$0xff]
    %v122 = vld [vmem:[#allocation5 + $0x8] sm:$0xff]
    %vm123 = vcmask 785408
    %v125 = vsel %vm123, %v121, 0
    %v128 = vsel %vm123, %v122, 0
    %130 = vmatprep.subr.mxu0 0.0
    %v131 = vand.u32 %v109, 4294901760
    %132 = vmatpush1.msra.mxu0 %v131
    %133 = vmatprep.subr.mxu0 0.0
    %v134 = vand.u32 %v110, 4294901760
    %135 = vmatpush1.msra.mxu0 %v134
    %136 = vmatprep.subr.mxu0 0.0
    %v137 = vand.u32 %v111, 4294901760
    %138 = vmatpush1.msra.mxu0 %v137
    %139 = vmatprep.subr.mxu0 0.0
    %v140 = vand.u32 %v112, 4294901760
    %141 = vmatpush1.msra.mxu0 %v140
    %142 = vmatprep.subr.mxu0 0.0
    %v143 = vand.u32 %v113, 4294901760
    %144 = vmatpush1.msra.mxu0 %v143
    %145 = vmatprep.subr.mxu0 0.0
    %v146 = vand.u32 %v114, 4294901760
    %147 = vmatpush1.msra.mxu0 %v146
    %148 = vmatprep.subr.mxu0 0.0
    %v149 = vand.u32 %v115, 4294901760
    %150 = vmatpush1.msra.mxu0 %v149
    %151 = vmatprep.subr.mxu0 0.0
    %v152 = vand.u32 %v116, 4294901760
    %153 = vmatpush1.msra.mxu0 %v152
    %154 = vmatprep.subr.mxu0 0.0
    %v155 = vand.u32 %v117, 4294901760
    %156 = vmatpush1.msra.mxu0 %v155
    %157 = vmatprep.subr.mxu0 0.0
    %v158 = vand.u32 %v118, 4294901760
    %159 = vmatpush1.msra.mxu0 %v158
    %160 = vmatprep.subr.mxu0 0.0
    %v161 = vand.u32 %v119, 4294901760
    %162 = vmatpush1.msra.mxu0 %v161
    %163 = vmatprep.subr.mxu0 0.0
    %v164 = vand.u32 %v120, 4294901760
    %165 = vmatpush1.msra.mxu0 %v164
    %166 = vmatprep.subr.mxu0 0.0
    %167 = vmatpush1.msra.mxu0 0.0
    %168 = vmatprep.subr.mxu0 0.0
    %169 = vmatpush1.msra.mxu0 0.0
    %170 = vmatprep.subr.mxu0 0.0
    %171 = vmatpush1.msra.mxu0 0.0
    %172 = vmatprep.subr.mxu0 0.0
    %173 = vmatpush1.msra.mxu0 0.0
    %174 = vmatprep.subr.mxu0 0.0
    %175 = vmatpush1.msra.mxu0 0.0
    %176 = vmatprep.subr.mxu0 0.0
    %177 = vmatpush1.msra.mxu0 0.0
    %178 = vmatprep.subr.mxu0 0.0
    %179 = vmatpush1.msra.mxu0 0.0
    %180 = vmatprep.subr.mxu0 0.0
    %181 = vmatpush1.msra.mxu0 0.0
    %182 = vmatprep.subr.mxu0 0.0
    %183 = vmatpush1.msra.mxu0 0.0
    %184 = vmatprep.subr.mxu0 0.0
    %185 = vmatpush1.msra.mxu0 0.0
    %186 = vmatprep.subr.mxu0 0.0
    %187 = vmatpush1.msra.mxu0 0.0
    %188 = vmatprep.subr.mxu0 0.0
    %189 = vmatpush1.msra.mxu0 0.0
    %190 = vmatprep.subr.mxu0 0.0
    %191 = vmatpush1.msra.mxu0 0.0
    %192 = vmatprep.subr.mxu0 0.0
    %193 = vmatpush1.msra.mxu0 0.0
    %194 = vmatprep.subr.mxu0 0.0
    %195 = vmatpush1.msra.mxu0 0.0
    %196 = vmatprep.subr.mxu0 0.0
    %197 = vmatpush1.msra.mxu0 0.0
    %198 = vmatprep.subr.mxu0 0.0
    %199 = vmatpush1.msra.mxu0 0.0
    %200 = vmatprep.subr.mxu0 0.0
    %201 = vmatpush1.msra.mxu0 0.0
    %202 = vmatprep.subr.mxu0 0.0
    %203 = vmatpush1.msra.mxu0 0.0
    %204 = vmatprep.subr.mxu0 0.0
    %205 = vmatpush1.msra.mxu0 0.0
    %206 = vmatprep.mubr.f32.mxu0 0.0
    %v207 = vand.u32 %v125, 4294901760
    %v208 = vsub.f32 %v125, %v207
    %v209 = vand.u32 %v208, 4294901760
    %v210 = vsub.f32 %v208, %v209
    %v211 = vand.u32 %v210, 4294901760
    %212 = vmatmul.mubr.f32.gmra.mrb[0].mxu0 %v211
    %v213 = vpop.f32.mrb[0].mxu0
    %v214 = vadd.f32 0.0, %v213
    %v215 = vpop.f32.mrb[0].mxu0
    %216 = vmatprep.mubr.f32.mxu0 0.0
    %v217 = vand.u32 %v128, 4294901760
    %v218 = vsub.f32 %v128, %v217
    %v219 = vand.u32 %v218, 4294901760
    %v220 = vsub.f32 %v218, %v219
    %v221 = vand.u32 %v220, 4294901760
    %222 = vmatmul.mubr.f32.gmra.mrb[0].mxu0 %v221
    %v223 = vpop.f32.mrb[0].mxu0
    %v224 = vadd.f32 0.0, %v223
    %v225 = vpop.f32.mrb[0].mxu0
    %226 = vdwg.mxu0
    %227 = vmatprep.subr.mxu0 0.0
    %v228 = vand.u32 %v109, 4294901760
    %v229 = vsub.f32 %v109, %v228
    %v230 = vand.u32 %v229, 4294901760
    %v231 = vsub.f32 %v229, %v230
    %v232 = vand.u32 %v231, 4294901760
    %233 = vmatpush1.msra.mxu0 %v232
    %234 = vmatprep.subr.mxu0 0.0
    %v235 = vand.u32 %v110, 4294901760
    %v236 = vsub.f32 %v110, %v235
    %v237 = vand.u32 %v236, 4294901760
    %v238 = vsub.f32 %v236, %v237
    %v239 = vand.u32 %v238, 4294901760
    %240 = vmatpush1.msra.mxu0 %v239
    %241 = vmatprep.subr.mxu0 0.0
    %v242 = vand.u32 %v111, 4294901760
    %v243 = vsub.f32 %v111, %v242
    %v244 = vand.u32 %v243, 4294901760
    %v245 = vsub.f32 %v243, %v244
    %v246 = vand.u32 %v245, 4294901760
    %247 = vmatpush1.msra.mxu0 %v246
    %248 = vmatprep.subr.mxu0 0.0
    %v249 = vand.u32 %v112, 4294901760
    %v250 = vsub.f32 %v112, %v249
    %v251 = vand.u32 %v250, 4294901760
    %v252 = vsub.f32 %v250, %v251
    %v253 = vand.u32 %v252, 4294901760
    %254 = vmatpush1.msra.mxu0 %v253
    %255 = vmatprep.subr.mxu0 0.0
    %v256 = vand.u32 %v113, 4294901760
    %v257 = vsub.f32 %v113, %v256
    %v258 = vand.u32 %v257, 4294901760
    %v259 = vsub.f32 %v257, %v258
    %v260 = vand.u32 %v259, 4294901760
    %261 = vmatpush1.msra.mxu0 %v260
    %262 = vmatprep.subr.mxu0 0.0
    %v263 = vand.u32 %v114, 4294901760
    %v264 = vsub.f32 %v114, %v263
    %v265 = vand.u32 %v264, 4294901760
    %v266 = vsub.f32 %v264, %v265
    %v267 = vand.u32 %v266, 4294901760
    %268 = vmatpush1.msra.mxu0 %v267
    %269 = vmatprep.subr.mxu0 0.0
    %v270 = vand.u32 %v115, 4294901760
    %v271 = vsub.f32 %v115, %v270
    %v272 = vand.u32 %v271, 4294901760
    %v273 = vsub.f32 %v271, %v272
    %v274 = vand.u32 %v273, 4294901760
    %275 = vmatpush1.msra.mxu0 %v274
    %276 = vmatprep.subr.mxu0 0.0
    %v277 = vand.u32 %v116, 4294901760
    %v278 = vsub.f32 %v116, %v277
    %v279 = vand.u32 %v278, 4294901760
    %v280 = vsub.f32 %v278, %v279
    %v281 = vand.u32 %v280, 4294901760
    %282 = vmatpush1.msra.mxu0 %v281
    %283 = vmatprep.subr.mxu0 0.0
    %v284 = vand.u32 %v117, 4294901760
    %v285 = vsub.f32 %v117, %v284
    %v286 = vand.u32 %v285, 4294901760
    %v287 = vsub.f32 %v285, %v286
    %v288 = vand.u32 %v287, 4294901760
    %289 = vmatpush1.msra.mxu0 %v288
    %290 = vmatprep.subr.mxu0 0.0
    %v291 = vand.u32 %v118, 4294901760
    %v292 = vsub.f32 %v118, %v291
    %v293 = vand.u32 %v292, 4294901760
    %v294 = vsub.f32 %v292, %v293
    %v295 = vand.u32 %v294, 4294901760
    %296 = vmatpush1.msra.mxu0 %v295
    %297 = vmatprep.subr.mxu0 0.0
    %v298 = vand.u32 %v119, 4294901760
    %v299 = vsub.f32 %v119, %v298
    %v300 = vand.u32 %v299, 4294901760
    %v301 = vsub.f32 %v299, %v300
    %v302 = vand.u32 %v301, 4294901760
    %303 = vmatpush1.msra.mxu0 %v302
    %304 = vmatprep.subr.mxu0 0.0
    %v305 = vand.u32 %v120, 4294901760
    %v306 = vsub.f32 %v120, %v305
    %v307 = vand.u32 %v306, 4294901760
    %v308 = vsub.f32 %v306, %v307
    %v309 = vand.u32 %v308, 4294901760
    %310 = vmatpush1.msra.mxu0 %v309
    %311 = vmatprep.subr.mxu0 0.0
    %312 = vmatpush1.msra.mxu0 0.0
    %313 = vmatprep.subr.mxu0 0.0
    %314 = vmatpush1.msra.mxu0 0.0
    %315 = vmatprep.subr.mxu0 0.0
    %316 = vmatpush1.msra.mxu0 0.0
    %317 = vmatprep.subr.mxu0 0.0
    %318 = vmatpush1.msra.mxu0 0.0
    %319 = vmatprep.subr.mxu0 0.0
    %320 = vmatpush1.msra.mxu0 0.0
    %321 = vmatprep.subr.mxu0 0.0
    %322 = vmatpush1.msra.mxu0 0.0
    %323 = vmatprep.subr.mxu0 0.0
    %324 = vmatpush1.msra.mxu0 0.0
    %325 = vmatprep.subr.mxu0 0.0
    %326 = vmatpush1.msra.mxu0 0.0
    %327 = vmatprep.subr.mxu0 0.0
    %328 = vmatpush1.msra.mxu0 0.0
    %329 = vmatprep.subr.mxu0 0.0
    %330 = vmatpush1.msra.mxu0 0.0
    %331 = vmatprep.subr.mxu0 0.0
    %332 = vmatpush1.msra.mxu0 0.0
    %333 = vmatprep.subr.mxu0 0.0
    %334 = vmatpush1.msra.mxu0 0.0
    %335 = vmatprep.subr.mxu0 0.0
    %336 = vmatpush1.msra.mxu0 0.0
    %337 = vmatprep.subr.mxu0 0.0
    %338 = vmatpush1.msra.mxu0 0.0
    %339 = vmatprep.subr.mxu0 0.0
    %340 = vmatpush1.msra.mxu0 0.0
    %341 = vmatprep.subr.mxu0 0.0
    %342 = vmatpush1.msra.mxu0 0.0
    %343 = vmatprep.subr.mxu0 0.0
    %344 = vmatpush1.msra.mxu0 0.0
    %345 = vmatprep.subr.mxu0 0.0
    %346 = vmatpush1.msra.mxu0 0.0
    %347 = vmatprep.subr.mxu0 0.0
    %348 = vmatpush1.msra.mxu0 0.0
    %349 = vmatprep.subr.mxu0 0.0
    %350 = vmatpush1.msra.mxu0 0.0
    %351 = vmatprep.mubr.f32.mxu0 0.0
    %v352 = vand.u32 %v125, 4294901760
    %353 = vmatmul.mubr.f32.gmra.mrb[0].mxu0 %v352
    %v354 = vpop.f32.mrb[0].mxu0
    %v355 = vadd.f32 %v214, %v354
    %v356 = vpop.f32.mrb[0].mxu0
    %357 = vmatprep.mubr.f32.mxu0 0.0
    %v358 = vand.u32 %v128, 4294901760
    %359 = vmatmul.mubr.f32.gmra.mrb[0].mxu0 %v358
    %v360 = vpop.f32.mrb[0].mxu0
    %v361 = vadd.f32 %v224, %v360
    %v362 = vpop.f32.mrb[0].mxu0
    %363 = vdwg.mxu0
    %364 = vmatprep.subr.mxu0 0.0
    %v365 = vand.u32 %v109, 4294901760
    %v366 = vsub.f32 %v109, %v365
    %367 = vmatpush1.msra.mxu0 %v366
    %368 = vmatprep.subr.mxu0 0.0
    %v369 = vand.u32 %v110, 4294901760
    %v370 = vsub.f32 %v110, %v369
    %371 = vmatpush1.msra.mxu0 %v370
    %372 = vmatprep.subr.mxu0 0.0
    %v373 = vand.u32 %v111, 4294901760
    %v374 = vsub.f32 %v111, %v373
    %375 = vmatpush1.msra.mxu0 %v374
    %376 = vmatprep.subr.mxu0 0.0
    %v377 = vand.u32 %v112, 4294901760
    %v378 = vsub.f32 %v112, %v377
    %379 = vmatpush1.msra.mxu0 %v378
    %380 = vmatprep.subr.mxu0 0.0
    %v381 = vand.u32 %v113, 4294901760
    %v382 = vsub.f32 %v113, %v381
    %383 = vmatpush1.msra.mxu0 %v382
    %384 = vmatprep.subr.mxu0 0.0
    %v385 = vand.u32 %v114, 4294901760
    %v386 = vsub.f32 %v114, %v385
    %387 = vmatpush1.msra.mxu0 %v386
    %388 = vmatprep.subr.mxu0 0.0
    %v389 = vand.u32 %v115, 4294901760
    %v390 = vsub.f32 %v115, %v389
    %391 = vmatpush1.msra.mxu0 %v390
    %392 = vmatprep.subr.mxu0 0.0
    %v393 = vand.u32 %v116, 4294901760
    %v394 = vsub.f32 %v116, %v393
    %395 = vmatpush1.msra.mxu0 %v394
    %396 = vmatprep.subr.mxu0 0.0
    %v397 = vand.u32 %v117, 4294901760
    %v398 = vsub.f32 %v117, %v397
    %399 = vmatpush1.msra.mxu0 %v398
    %400 = vmatprep.subr.mxu0 0.0
    %v401 = vand.u32 %v118, 4294901760
    %v402 = vsub.f32 %v118, %v401
    %403 = vmatpush1.msra.mxu0 %v402
    %404 = vmatprep.subr.mxu0 0.0
    %v405 = vand.u32 %v119, 4294901760
    %v406 = vsub.f32 %v119, %v405
    %407 = vmatpush1.msra.mxu0 %v406
    %408 = vmatprep.subr.mxu0 0.0
    %v409 = vand.u32 %v120, 4294901760
    %v410 = vsub.f32 %v120, %v409
    %411 = vmatpush1.msra.mxu0 %v410
    %412 = vmatprep.subr.mxu0 0.0
    %413 = vmatpush1.msra.mxu0 0.0
    %414 = vmatprep.subr.mxu0 0.0
    %415 = vmatpush1.msra.mxu0 0.0
    %416 = vmatprep.subr.mxu0 0.0
    %417 = vmatpush1.msra.mxu0 0.0
    %418 = vmatprep.subr.mxu0 0.0
    %419 = vmatpush1.msra.mxu0 0.0
    %420 = vmatprep.subr.mxu0 0.0
    %421 = vmatpush1.msra.mxu0 0.0
    %422 = vmatprep.subr.mxu0 0.0
    %423 = vmatpush1.msra.mxu0 0.0
    %424 = vmatprep.subr.mxu0 0.0
    %425 = vmatpush1.msra.mxu0 0.0
    %426 = vmatprep.subr.mxu0 0.0
    %427 = vmatpush1.msra.mxu0 0.0
    %428 = vmatprep.subr.mxu0 0.0
    %429 = vmatpush1.msra.mxu0 0.0
    %430 = vmatprep.subr.mxu0 0.0
    %431 = vmatpush1.msra.mxu0 0.0
    %432 = vmatprep.subr.mxu0 0.0
    %433 = vmatpush1.msra.mxu0 0.0
    %434 = vmatprep.subr.mxu0 0.0
    %435 = vmatpush1.msra.mxu0 0.0
    %436 = vmatprep.subr.mxu0 0.0
    %437 = vmatpush1.msra.mxu0 0.0
    %438 = vmatprep.subr.mxu0 0.0
    %439 = vmatpush1.msra.mxu0 0.0
    %440 = vmatprep.subr.mxu0 0.0
    %441 = vmatpush1.msra.mxu0 0.0
    %442 = vmatprep.subr.mxu0 0.0
    %443 = vmatpush1.msra.mxu0 0.0
    %444 = vmatprep.subr.mxu0 0.0
    %445 = vmatpush1.msra.mxu0 0.0
    %446 = vmatprep.subr.mxu0 0.0
    %447 = vmatpush1.msra.mxu0 0.0
    %448 = vmatprep.subr.mxu0 0.0
    %449 = vmatpush1.msra.mxu0 0.0
    %450 = vmatprep.subr.mxu0 0.0
    %451 = vmatpush1.msra.mxu0 0.0
    %452 = vmatprep.mubr.f32.mxu0 0.0
    %v453 = vand.u32 %v125, 4294901760
    %v454 = vsub.f32 %v125, %v453
    %455 = vmatmul.mubr.f32.gmra.mrb[0].mxu0 %v454
    %v456 = vpop.f32.mrb[0].mxu0
    %v457 = vadd.f32 %v355, %v456
    %v458 = vpop.f32.mrb[0].mxu0
    %459 = vmatprep.mubr.f32.mxu0 0.0
    %v460 = vand.u32 %v128, 4294901760
    %v461 = vsub.f32 %v128, %v460
    %462 = vmatmul.mubr.f32.gmra.mrb[0].mxu0 %v461
    %v463 = vpop.f32.mrb[0].mxu0
    %v464 = vadd.f32 %v361, %v463
    %v465 = vpop.f32.mrb[0].mxu0
    %466 = vdwg.mxu0
    %467 = vmatprep.subr.mxu0 0.0
    %v468 = vand.u32 %v109, 4294901760
    %469 = vmatpush1.msra.mxu0 %v468
    %470 = vmatprep.subr.mxu0 0.0
    %v471 = vand.u32 %v110, 4294901760
    %472 = vmatpush1.msra.mxu0 %v471
    %473 = vmatprep.subr.mxu0 0.0
    %v474 = vand.u32 %v111, 4294901760
    %475 = vmatpush1.msra.mxu0 %v474
    %476 = vmatprep.subr.mxu0 0.0
    %v477 = vand.u32 %v112, 4294901760
    %478 = vmatpush1.msra.mxu0 %v477
    %479 = vmatprep.subr.mxu0 0.0
    %v480 = vand.u32 %v113, 4294901760
    %481 = vmatpush1.msra.mxu0 %v480
    %482 = vmatprep.subr.mxu0 0.0
    %v483 = vand.u32 %v114, 4294901760
    %484 = vmatpush1.msra.mxu0 %v483
    %485 = vmatprep.subr.mxu0 0.0
    %v486 = vand.u32 %v115, 4294901760
    %487 = vmatpush1.msra.mxu0 %v486
    %488 = vmatprep.subr.mxu0 0.0
    %v489 = vand.u32 %v116, 4294901760
    %490 = vmatpush1.msra.mxu0 %v489
    %491 = vmatprep.subr.mxu0 0.0
    %v492 = vand.u32 %v117, 4294901760
    %493 = vmatpush1.msra.mxu0 %v492
    %494 = vmatprep.subr.mxu0 0.0
    %v495 = vand.u32 %v118, 4294901760
    %496 = vmatpush1.msra.mxu0 %v495
    %497 = vmatprep.subr.mxu0 0.0
    %v498 = vand.u32 %v119, 4294901760
    %499 = vmatpush1.msra.mxu0 %v498
    %500 = vmatprep.subr.mxu0 0.0
    %v501 = vand.u32 %v120, 4294901760
    %502 = vmatpush1.msra.mxu0 %v501
    %503 = vmatprep.subr.mxu0 0.0
    %504 = vmatpush1.msra.mxu0 0.0
    %505 = vmatprep.subr.mxu0 0.0
    %506 = vmatpush1.msra.mxu0 0.0
    %507 = vmatprep.subr.mxu0 0.0
    %508 = vmatpush1.msra.mxu0 0.0
    %509 = vmatprep.subr.mxu0 0.0
    %510 = vmatpush1.msra.mxu0 0.0
    %511 = vmatprep.subr.mxu0 0.0
    %512 = vmatpush1.msra.mxu0 0.0
    %513 = vmatprep.subr.mxu0 0.0
    %514 = vmatpush1.msra.mxu0 0.0
    %515 = vmatprep.subr.mxu0 0.0
    %516 = vmatpush1.msra.mxu0 0.0
    %517 = vmatprep.subr.mxu0 0.0
    %518 = vmatpush1.msra.mxu0 0.0
    %519 = vmatprep.subr.mxu0 0.0
    %520 = vmatpush1.msra.mxu0 0.0
    %521 = vmatprep.subr.mxu0 0.0
    %522 = vmatpush1.msra.mxu0 0.0
    %523 = vmatprep.subr.mxu0 0.0
    %524 = vmatpush1.msra.mxu0 0.0
    %525 = vmatprep.subr.mxu0 0.0
    %526 = vmatpush1.msra.mxu0 0.0
    %527 = vmatprep.subr.mxu0 0.0
    %528 = vmatpush1.msra.mxu0 0.0
    %529 = vmatprep.subr.mxu0 0.0
    %530 = vmatpush1.msra.mxu0 0.0
    %531 = vmatprep.subr.mxu0 0.0
    %532 = vmatpush1.msra.mxu0 0.0
    %533 = vmatprep.subr.mxu0 0.0
    %534 = vmatpush1.msra.mxu0 0.0
    %535 = vmatprep.subr.mxu0 0.0
    %536 = vmatpush1.msra.mxu0 0.0
    %537 = vmatprep.subr.mxu0 0.0
    %538 = vmatpush1.msra.mxu0 0.0
    %539 = vmatprep.subr.mxu0 0.0
    %540 = vmatpush1.msra.mxu0 0.0
    %541 = vmatprep.subr.mxu0 0.0
    %542 = vmatpush1.msra.mxu0 0.0
    %543 = vmatprep.mubr.f32.mxu0 0.0
    %v544 = vand.u32 %v125, 4294901760
    %v545 = vsub.f32 %v125, %v544
    %v546 = vand.u32 %v545, 4294901760
    %547 = vmatmul.mubr.f32.gmra.mrb[0].mxu0 %v546
    %v548 = vpop.f32.mrb[0].mxu0
    %v549 = vadd.f32 %v457, %v548
    %v550 = vpop.f32.mrb[0].mxu0
    %551 = vmatprep.mubr.f32.mxu0 0.0
    %v552 = vand.u32 %v128, 4294901760
    %v553 = vsub.f32 %v128, %v552
    %v554 = vand.u32 %v553, 4294901760
    %555 = vmatmul.mubr.f32.gmra.mrb[0].mxu0 %v554
    %v556 = vpop.f32.mrb[0].mxu0
    %v557 = vadd.f32 %v464, %v556
    %v558 = vpop.f32.mrb[0].mxu0
    %559 = vdwg.mxu0
    %560 = vmatprep.subr.mxu0 0.0
    %v561 = vand.u32 %v109, 4294901760
    %v562 = vsub.f32 %v109, %v561
    %v563 = vand.u32 %v562, 4294901760
    %564 = vmatpush1.msra.mxu0 %v563
    %565 = vmatprep.subr.mxu0 0.0
    %v566 = vand.u32 %v110, 4294901760
    %v567 = vsub.f32 %v110, %v566
    %v568 = vand.u32 %v567, 4294901760
    %569 = vmatpush1.msra.mxu0 %v568
    %570 = vmatprep.subr.mxu0 0.0
    %v571 = vand.u32 %v111, 4294901760
    %v572 = vsub.f32 %v111, %v571
    %v573 = vand.u32 %v572, 4294901760
    %574 = vmatpush1.msra.mxu0 %v573
    %575 = vmatprep.subr.mxu0 0.0
    %v576 = vand.u32 %v112, 4294901760
    %v577 = vsub.f32 %v112, %v576
    %v578 = vand.u32 %v577, 4294901760
    %579 = vmatpush1.msra.mxu0 %v578
    %580 = vmatprep.subr.mxu0 0.0
    %v581 = vand.u32 %v113, 4294901760
    %v582 = vsub.f32 %v113, %v581
    %v583 = vand.u32 %v582, 4294901760
    %584 = vmatpush1.msra.mxu0 %v583
    %585 = vmatprep.subr.mxu0 0.0
    %v586 = vand.u32 %v114, 4294901760
    %v587 = vsub.f32 %v114, %v586
    %v588 = vand.u32 %v587, 4294901760
    %589 = vmatpush1.msra.mxu0 %v588
    %590 = vmatprep.subr.mxu0 0.0
    %v591 = vand.u32 %v115, 4294901760
    %v592 = vsub.f32 %v115, %v591
    %v593 = vand.u32 %v592, 4294901760
    %594 = vmatpush1.msra.mxu0 %v593
    %595 = vmatprep.subr.mxu0 0.0
    %v596 = vand.u32 %v116, 4294901760
    %v597 = vsub.f32 %v116, %v596
    %v598 = vand.u32 %v597, 4294901760
    %599 = vmatpush1.msra.mxu0 %v598
    %600 = vmatprep.subr.mxu0 0.0
    %v601 = vand.u32 %v117, 4294901760
    %v602 = vsub.f32 %v117, %v601
    %v603 = vand.u32 %v602, 4294901760
    %604 = vmatpush1.msra.mxu0 %v603
    %605 = vmatprep.subr.mxu0 0.0
    %v606 = vand.u32 %v118, 4294901760
    %v607 = vsub.f32 %v118, %v606
    %v608 = vand.u32 %v607, 4294901760
    %609 = vmatpush1.msra.mxu0 %v608
    %610 = vmatprep.subr.mxu0 0.0
    %v611 = vand.u32 %v119, 4294901760
    %v612 = vsub.f32 %v119, %v611
    %v613 = vand.u32 %v612, 4294901760
    %614 = vmatpush1.msra.mxu0 %v613
    %615 = vmatprep.subr.mxu0 0.0
    %v616 = vand.u32 %v120, 4294901760
    %v617 = vsub.f32 %v120, %v616
    %v618 = vand.u32 %v617, 4294901760
    %619 = vmatpush1.msra.mxu0 %v618
    %620 = vmatprep.subr.mxu0 0.0
    %621 = vmatpush1.msra.mxu0 0.0
    %622 = vmatprep.subr.mxu0 0.0
    %623 = vmatpush1.msra.mxu0 0.0
    %624 = vmatprep.subr.mxu0 0.0
    %625 = vmatpush1.msra.mxu0 0.0
    %626 = vmatprep.subr.mxu0 0.0
    %627 = vmatpush1.msra.mxu0 0.0
    %628 = vmatprep.subr.mxu0 0.0
    %629 = vmatpush1.msra.mxu0 0.0
    %630 = vmatprep.subr.mxu0 0.0
    %631 = vmatpush1.msra.mxu0 0.0
    %632 = vmatprep.subr.mxu0 0.0
    %633 = vmatpush1.msra.mxu0 0.0
    %634 = vmatprep.subr.mxu0 0.0
    %635 = vmatpush1.msra.mxu0 0.0
    %636 = vmatprep.subr.mxu0 0.0
    %637 = vmatpush1.msra.mxu0 0.0
    %638 = vmatprep.subr.mxu0 0.0
    %639 = vmatpush1.msra.mxu0 0.0
    %640 = vmatprep.subr.mxu0 0.0
    %641 = vmatpush1.msra.mxu0 0.0
    %642 = vmatprep.subr.mxu0 0.0
    %643 = vmatpush1.msra.mxu0 0.0
    %644 = vmatprep.subr.mxu0 0.0
    %645 = vmatpush1.msra.mxu0 0.0
    %646 = vmatprep.subr.mxu0 0.0
    %647 = vmatpush1.msra.mxu0 0.0
    %648 = vmatprep.subr.mxu0 0.0
    %649 = vmatpush1.msra.mxu0 0.0
    %650 = vmatprep.subr.mxu0 0.0
    %651 = vmatpush1.msra.mxu0 0.0
    %652 = vmatprep.subr.mxu0 0.0
    %653 = vmatpush1.msra.mxu0 0.0
    %654 = vmatprep.subr.mxu0 0.0
    %655 = vmatpush1.msra.mxu0 0.0
    %656 = vmatprep.subr.mxu0 0.0
    %657 = vmatpush1.msra.mxu0 0.0
    %658 = vmatprep.subr.mxu0 0.0
    %659 = vmatpush1.msra.mxu0 0.0
    %660 = vmatprep.mubr.f32.mxu0 0.0
    %v661 = vand.u32 %v125, 4294901760
    %662 = vmatmul.mubr.f32.gmra.mrb[0].mxu0 %v661
    %v663 = vpop.f32.mrb[0].mxu0
    %v664 = vadd.f32 %v549, %v663
    %v665 = vpop.f32.mrb[0].mxu0
    %666 = vmatprep.mubr.f32.mxu0 0.0
    %v667 = vand.u32 %v128, 4294901760
    %668 = vmatmul.mubr.f32.gmra.mrb[0].mxu0 %v667
    %v669 = vpop.f32.mrb[0].mxu0
    %v670 = vadd.f32 %v557, %v669
    %v671 = vpop.f32.mrb[0].mxu0
    %672 = vdwg.mxu0
    %673 = vmatprep.subr.mxu0 0.0
    %v674 = vand.u32 %v109, 4294901760
    %675 = vmatpush1.msra.mxu0 %v674
    %676 = vmatprep.subr.mxu0 0.0
    %v677 = vand.u32 %v110, 4294901760
    %678 = vmatpush1.msra.mxu0 %v677
    %679 = vmatprep.subr.mxu0 0.0
    %v680 = vand.u32 %v111, 4294901760
    %681 = vmatpush1.msra.mxu0 %v680
    %682 = vmatprep.subr.mxu0 0.0
    %v683 = vand.u32 %v112, 4294901760
    %684 = vmatpush1.msra.mxu0 %v683
    %685 = vmatprep.subr.mxu0 0.0
    %v686 = vand.u32 %v113, 4294901760
    %687 = vmatpush1.msra.mxu0 %v686
    %688 = vmatprep.subr.mxu0 0.0
    %v689 = vand.u32 %v114, 4294901760
    %690 = vmatpush1.msra.mxu0 %v689
    %691 = vmatprep.subr.mxu0 0.0
    %v692 = vand.u32 %v115, 4294901760
    %693 = vmatpush1.msra.mxu0 %v692
    %694 = vmatprep.subr.mxu0 0.0
    %v695 = vand.u32 %v116, 4294901760
    %696 = vmatpush1.msra.mxu0 %v695
    %697 = vmatprep.subr.mxu0 0.0
    %v698 = vand.u32 %v117, 4294901760
    %699 = vmatpush1.msra.mxu0 %v698
    %700 = vmatprep.subr.mxu0 0.0
    %v701 = vand.u32 %v118, 4294901760
    %702 = vmatpush1.msra.mxu0 %v701
    %703 = vmatprep.subr.mxu0 0.0
    %v704 = vand.u32 %v119, 4294901760
    %705 = vmatpush1.msra.mxu0 %v704
    %706 = vmatprep.subr.mxu0 0.0
    %v707 = vand.u32 %v120, 4294901760
    %708 = vmatpush1.msra.mxu0 %v707
    %709 = vmatprep.subr.mxu0 0.0
    %710 = vmatpush1.msra.mxu0 0.0
    %711 = vmatprep.subr.mxu0 0.0
    %712 = vmatpush1.msra.mxu0 0.0
    %713 = vmatprep.subr.mxu0 0.0
    %714 = vmatpush1.msra.mxu0 0.0
    %715 = vmatprep.subr.mxu0 0.0
    %716 = vmatpush1.msra.mxu0 0.0
    %717 = vmatprep.subr.mxu0 0.0
    %718 = vmatpush1.msra.mxu0 0.0
    %719 = vmatprep.subr.mxu0 0.0
    %720 = vmatpush1.msra.mxu0 0.0
    %721 = vmatprep.subr.mxu0 0.0
    %722 = vmatpush1.msra.mxu0 0.0
    %723 = vmatprep.subr.mxu0 0.0
    %724 = vmatpush1.msra.mxu0 0.0
    %725 = vmatprep.subr.mxu0 0.0
    %726 = vmatpush1.msra.mxu0 0.0
    %727 = vmatprep.subr.mxu0 0.0
    %728 = vmatpush1.msra.mxu0 0.0
    %729 = vmatprep.subr.mxu0 0.0
    %730 = vmatpush1.msra.mxu0 0.0
    %731 = vmatprep.subr.mxu0 0.0
    %732 = vmatpush1.msra.mxu0 0.0
    %733 = vmatprep.subr.mxu0 0.0
    %734 = vmatpush1.msra.mxu0 0.0
    %735 = vmatprep.subr.mxu0 0.0
    %736 = vmatpush1.msra.mxu0 0.0
    %737 = vmatprep.subr.mxu0 0.0
    %738 = vmatpush1.msra.mxu0 0.0
    %739 = vmatprep.subr.mxu0 0.0
    %740 = vmatpush1.msra.mxu0 0.0
    %741 = vmatprep.subr.mxu0 0.0
    %742 = vmatpush1.msra.mxu0 0.0
    %743 = vmatprep.subr.mxu0 0.0
    %744 = vmatpush1.msra.mxu0 0.0
    %745 = vmatprep.subr.mxu0 0.0
    %746 = vmatpush1.msra.mxu0 0.0
    %747 = vmatprep.subr.mxu0 0.0
    %748 = vmatpush1.msra.mxu0 0.0
    %749 = vmatprep.mubr.f32.mxu0 0.0
    %v750 = vand.u32 %v125, 4294901760
    %751 = vmatmul.mubr.f32.gmra.mrb[0].mxu0 %v750
    %v752 = vpop.f32.mrb[0].mxu0
    %v753 = vadd.f32 %v664, %v752
    %v754 = vpop.f32.mrb[0].mxu0
    %755 = vmatprep.mubr.f32.mxu0 0.0
    %v756 = vand.u32 %v128, 4294901760
    %757 = vmatmul.mubr.f32.gmra.mrb[0].mxu0 %v756
    %v758 = vpop.f32.mrb[0].mxu0
    %v759 = vadd.f32 %v670, %v758
    %v760 = vpop.f32.mrb[0].mxu0
    %761 = vdwg.mxu0
    %v762 = vlaneseq
    %v763 = vand.u32 %v762, 127
    %vm764 = vcmp.lt.s32.totalorder %v41, 8
    %vm765 = vcmp.lt.s32.totalorder %v42, 8
    %vm766 = vcmp.lt.s32.totalorder %v763, 8
    %vm767 = vmxor %vm764, %vm766
    %vm768 = vmxor %vm765, %vm766
    %vm769 = vmxor %vm767, 1
    %vm770 = vmxor %vm768, 1
    %v771 = vsub.s32 %v41, %v763
    %v772 = vsub.s32 %v42, %v763
    %vm773 = vcmp.lt.s32.totalorder %v771, 0
    %v774 = vsub.s32 0, %v771
    %v775 = vsel %vm773, %v774, %v771
    %vm776 = vcmp.lt.s32.totalorder %v772, 0
    %v777 = vsub.s32 0, %v772
    %v778 = vsel %vm776, %v777, %v772
    %vm779 = vcmp.eq.s32.totalorder %v775, 4
    %vm780 = vcmp.eq.s32.totalorder %v778, 4
    %vm781 = vmand %vm779, %vm769
    %vm782 = vmand %vm780, %vm770
    %v783 = vsel %vm781, 1, 0
    %v784 = vsel %vm782, 1, 0
    %v785 = vcvt.s32.f32 %v783
    %v786 = vcvt.s32.f32 %v784
    %vm787 = vcmask 130048
    %v789 = vsel %vm787, %v785, 0
    %v792 = vsel %vm787, %v786, 0
    %794 = vmatprep.subr.mxu0 0.0
    %v795 = vand.u32 %v753, 4294901760
    %796 = vmatpush1.msra.mxu0 %v795
    %797 = vmatprep.subr.mxu0 0.0
    %v798 = vand.u32 %v759, 4294901760
    %799 = vmatpush1.msra.mxu0 %v798
    %800 = vmatprep.subr.mxu0 0.0
    %801 = vmatpush1.msra.mxu0 0.0
    %802 = vmatprep.subr.mxu0 0.0
    %803 = vmatpush1.msra.mxu0 0.0
    %804 = vmatprep.subr.mxu0 0.0
    %805 = vmatpush1.msra.mxu0 0.0
    %806 = vmatprep.subr.mxu0 0.0
    %807 = vmatpush1.msra.mxu0 0.0
    %808 = vmatprep.subr.mxu0 0.0
    %809 = vmatpush1.msra.mxu0 0.0
    %810 = vmatprep.subr.mxu0 0.0
    %811 = vmatpush1.msra.mxu0 0.0
    %812 = vmatprep.subr.mxu0 0.0
    %813 = vmatpush1.msra.mxu0 0.0
    %814 = vmatprep.subr.mxu0 0.0
    %815 = vmatpush1.msra.mxu0 0.0
    %816 = vmatprep.subr.mxu0 0.0
    %817 = vmatpush1.msra.mxu0 0.0
    %818 = vmatprep.subr.mxu0 0.0
    %819 = vmatpush1.msra.mxu0 0.0
    %820 = vmatprep.subr.mxu0 0.0
    %821 = vmatpush1.msra.mxu0 0.0
    %822 = vmatprep.subr.mxu0 0.0
    %823 = vmatpush1.msra.mxu0 0.0
    %824 = vmatprep.subr.mxu0 0.0
    %825 = vmatpush1.msra.mxu0 0.0
    %826 = vmatprep.subr.mxu0 0.0
    %827 = vmatpush1.msra.mxu0 0.0
    %828 = vmatprep.subr.mxu0 0.0
    %829 = vmatpush1.msra.mxu0 0.0
    %830 = vmatprep.subr.mxu0 0.0
    %831 = vmatpush1.msra.mxu0 0.0
    %832 = vmatprep.subr.mxu0 0.0
    %833 = vmatpush1.msra.mxu0 0.0
    %834 = vmatprep.subr.mxu0 0.0
    %835 = vmatpush1.msra.mxu0 0.0
    %836 = vmatprep.subr.mxu0 0.0
    %837 = vmatpush1.msra.mxu0 0.0
    %838 = vmatprep.subr.mxu0 0.0
    %839 = vmatpush1.msra.mxu0 0.0
    %840 = vmatprep.subr.mxu0 0.0
    %841 = vmatpush1.msra.mxu0 0.0
    %842 = vmatprep.subr.mxu0 0.0
    %843 = vmatpush1.msra.mxu0 0.0
    %844 = vmatprep.subr.mxu0 0.0
    %845 = vmatpush1.msra.mxu0 0.0
    %846 = vmatprep.subr.mxu0 0.0
    %847 = vmatpush1.msra.mxu0 0.0
    %848 = vmatprep.subr.mxu0 0.0
    %849 = vmatpush1.msra.mxu0 0.0
    %850 = vmatprep.subr.mxu0 0.0
    %851 = vmatpush1.msra.mxu0 0.0
    %852 = vmatprep.subr.mxu0 0.0
    %853 = vmatpush1.msra.mxu0 0.0
    %854 = vmatprep.subr.mxu0 0.0
    %855 = vmatpush1.msra.mxu0 0.0
    %856 = vmatprep.subr.mxu0 0.0
    %857 = vmatpush1.msra.mxu0 0.0
    %858 = vmatprep.subr.mxu0 0.0
    %859 = vmatpush1.msra.mxu0 0.0
    %860 = vmatprep.mubr.f32.mxu0 0.0
    %v861 = vand.u32 %v789, 4294901760
    %v862 = vsub.f32 %v789, %v861
    %v863 = vand.u32 %v862, 4294901760
    %v864 = vsub.f32 %v862, %v863
    %v865 = vand.u32 %v864, 4294901760
    %866 = vmatmul.mubr.f32.gmra.mrb[0].mxu0 %v865
    %v867 = vpop.f32.mrb[0].mxu0
    %v868 = vadd.f32 0.0, %v867
    %v869 = vpop.f32.mrb[0].mxu0
    %870 = vmatprep.mubr.f32.mxu0 0.0
    %v871 = vand.u32 %v792, 4294901760
    %v872 = vsub.f32 %v792, %v871
    %v873 = vand.u32 %v872, 4294901760
    %v874 = vsub.f32 %v872, %v873
    %v875 = vand.u32 %v874, 4294901760
    %876 = vmatmul.mubr.f32.gmra.mrb[0].mxu0 %v875
    %v877 = vpop.f32.mrb[0].mxu0
    %v878 = vadd.f32 0.0, %v877
    %v879 = vpop.f32.mrb[0].mxu0
    %880 = vdwg.mxu0
    %881 = vmatprep.subr.mxu0 0.0
    %v882 = vand.u32 %v753, 4294901760
    %v883 = vsub.f32 %v753, %v882
    %v884 = vand.u32 %v883, 4294901760
    %v885 = vsub.f32 %v883, %v884
    %v886 = vand.u32 %v885, 4294901760
    %887 = vmatpush1.msra.mxu0 %v886
    %888 = vmatprep.subr.mxu0 0.0
    %v889 = vand.u32 %v759, 4294901760
    %v890 = vsub.f32 %v759, %v889
    %v891 = vand.u32 %v890, 4294901760
    %v892 = vsub.f32 %v890, %v891
    %v893 = vand.u32 %v892, 4294901760
    %894 = vmatpush1.msra.mxu0 %v893
    %895 = vmatprep.subr.mxu0 0.0
    %896 = vmatpush1.msra.mxu0 0.0
    %897 = vmatprep.subr.mxu0 0.0
    %898 = vmatpush1.msra.mxu0 0.0
    %899 = vmatprep.subr.mxu0 0.0
    %900 = vmatpush1.msra.mxu0 0.0
    %901 = vmatprep.subr.mxu0 0.0
    %902 = vmatpush1.msra.mxu0 0.0
    %903 = vmatprep.subr.mxu0 0.0
    %904 = vmatpush1.msra.mxu0 0.0
    %905 = vmatprep.subr.mxu0 0.0
    %906 = vmatpush1.msra.mxu0 0.0
    %907 = vmatprep.subr.mxu0 0.0
    %908 = vmatpush1.msra.mxu0 0.0
    %909 = vmatprep.subr.mxu0 0.0
    %910 = vmatpush1.msra.mxu0 0.0
    %911 = vmatprep.subr.mxu0 0.0
    %912 = vmatpush1.msra.mxu0 0.0
    %913 = vmatprep.subr.mxu0 0.0
    %914 = vmatpush1.msra.mxu0 0.0
    %915 = vmatprep.subr.mxu0 0.0
    %916 = vmatpush1.msra.mxu0 0.0
    %917 = vmatprep.subr.mxu0 0.0
    %918 = vmatpush1.msra.mxu0 0.0
    %919 = vmatprep.subr.mxu0 0.0
    %920 = vmatpush1.msra.mxu0 0.0
    %921 = vmatprep.subr.mxu0 0.0
    %922 = vmatpush1.msra.mxu0 0.0
    %923 = vmatprep.subr.mxu0 0.0
    %924 = vmatpush1.msra.mxu0 0.0
    %925 = vmatprep.subr.mxu0 0.0
    %926 = vmatpush1.msra.mxu0 0.0
    %927 = vmatprep.subr.mxu0 0.0
    %928 = vmatpush1.msra.mxu0 0.0
    %929 = vmatprep.subr.mxu0 0.0
    %930 = vmatpush1.msra.mxu0 0.0
    %931 = vmatprep.subr.mxu0 0.0
    %932 = vmatpush1.msra.mxu0 0.0
    %933 = vmatprep.subr.mxu0 0.0
    %934 = vmatpush1.msra.mxu0 0.0
    %935 = vmatprep.subr.mxu0 0.0
    %936 = vmatpush1.msra.mxu0 0.0
    %937 = vmatprep.subr.mxu0 0.0
    %938 = vmatpush1.msra.mxu0 0.0
    %939 = vmatprep.subr.mxu0 0.0
    %940 = vmatpush1.msra.mxu0 0.0
    %941 = vmatprep.subr.mxu0 0.0
    %942 = vmatpush1.msra.mxu0 0.0
    %943 = vmatprep.subr.mxu0 0.0
    %944 = vmatpush1.msra.mxu0 0.0
    %945 = vmatprep.subr.mxu0 0.0
    %946 = vmatpush1.msra.mxu0 0.0
    %947 = vmatprep.subr.mxu0 0.0
    %948 = vmatpush1.msra.mxu0 0.0
    %949 = vmatprep.subr.mxu0 0.0
    %950 = vmatpush1.msra.mxu0 0.0
    %951 = vmatprep.subr.mxu0 0.0
    %952 = vmatpush1.msra.mxu0 0.0
    %953 = vmatprep.subr.mxu0 0.0
    %954 = vmatpush1.msra.mxu0 0.0
    %955 = vmatprep.mubr.f32.mxu0 0.0
    %v956 = vand.u32 %v789, 4294901760
    %957 = vmatmul.mubr.f32.gmra.mrb[0].mxu0 %v956
    %v958 = vpop.f32.mrb[0].mxu0
    %v959 = vadd.f32 %v868, %v958
    %v960 = vpop.f32.mrb[0].mxu0
    %961 = vmatprep.mubr.f32.mxu0 0.0
    %v962 = vand.u32 %v792, 4294901760
    %963 = vmatmul.mubr.f32.gmra.mrb[0].mxu0 %v962
    %v964 = vpop.f32.mrb[0].mxu0
    %v965 = vadd.f32 %v878, %v964
    %v966 = vpop.f32.mrb[0].mxu0
    %967 = vdwg.mxu0
    %968 = vmatprep.subr.mxu0 0.0
    %v969 = vand.u32 %v753, 4294901760
    %v970 = vsub.f32 %v753, %v969
    %971 = vmatpush1.msra.mxu0 %v970
    %972 = vmatprep.subr.mxu0 0.0
    %v973 = vand.u32 %v759, 4294901760
    %v974 = vsub.f32 %v759, %v973
    %975 = vmatpush1.msra.mxu0 %v974
    %976 = vmatprep.subr.mxu0 0.0
    %977 = vmatpush1.msra.mxu0 0.0
    %978 = vmatprep.subr.mxu0 0.0
    %979 = vmatpush1.msra.mxu0 0.0
    %980 = vmatprep.subr.mxu0 0.0
    %981 = vmatpush1.msra.mxu0 0.0
    %982 = vmatprep.subr.mxu0 0.0
    %983 = vmatpush1.msra.mxu0 0.0
    %984 = vmatprep.subr.mxu0 0.0
    %985 = vmatpush1.msra.mxu0 0.0
    %986 = vmatprep.subr.mxu0 0.0
    %987 = vmatpush1.msra.mxu0 0.0
    %988 = vmatprep.subr.mxu0 0.0
    %989 = vmatpush1.msra.mxu0 0.0
    %990 = vmatprep.subr.mxu0 0.0
    %991 = vmatpush1.msra.mxu0 0.0
    %992 = vmatprep.subr.mxu0 0.0
    %993 = vmatpush1.msra.mxu0 0.0
    %994 = vmatprep.subr.mxu0 0.0
    %995 = vmatpush1.msra.mxu0 0.0
    %996 = vmatprep.subr.mxu0 0.0
    %997 = vmatpush1.msra.mxu0 0.0
    %998 = vmatprep.subr.mxu0 0.0
    %999 = vmatpush1.msra.mxu0 0.0
    %1000 = vmatprep.subr.mxu0 0.0
    %1001 = vmatpush1.msra.mxu0 0.0
    %1002 = vmatprep.subr.mxu0 0.0
    %1003 = vmatpush1.msra.mxu0 0.0
    %1004 = vmatprep.subr.mxu0 0.0
    %1005 = vmatpush1.msra.mxu0 0.0
    %1006 = vmatprep.subr.mxu0 0.0
    %1007 = vmatpush1.msra.mxu0 0.0
    %1008 = vmatprep.subr.mxu0 0.0
    %1009 = vmatpush1.msra.mxu0 0.0
    %1010 = vmatprep.subr.mxu0 0.0
    %1011 = vmatpush1.msra.mxu0 0.0
    %1012 = vmatprep.subr.mxu0 0.0
    %1013 = vmatpush1.msra.mxu0 0.0
    %1014 = vmatprep.subr.mxu0 0.0
    %1015 = vmatpush1.msra.mxu0 0.0
    %1016 = vmatprep.subr.mxu0 0.0
    %1017 = vmatpush1.msra.mxu0 0.0
    %1018 = vmatprep.subr.mxu0 0.0
    %1019 = vmatpush1.msra.mxu0 0.0
    %1020 = vmatprep.subr.mxu0 0.0
    %1021 = vmatpush1.msra.mxu0 0.0
    %1022 = vmatprep.subr.mxu0 0.0
    %1023 = vmatpush1.msra.mxu0 0.0
    %1024 = vmatprep.subr.mxu0 0.0
    %1025 = vmatpush1.msra.mxu0 0.0
    %1026 = vmatprep.subr.mxu0 0.0
    %1027 = vmatpush1.msra.mxu0 0.0
    %1028 = vmatprep.subr.mxu0 0.0
    %1029 = vmatpush1.msra.mxu0 0.0
    %1030 = vmatprep.subr.mxu0 0.0
    %1031 = vmatpush1.msra.mxu0 0.0
    %1032 = vmatprep.subr.mxu0 0.0
    %1033 = vmatpush1.msra.mxu0 0.0
    %1034 = vmatprep.subr.mxu0 0.0
    %1035 = vmatpush1.msra.mxu0 0.0
    %1036 = vmatprep.mubr.f32.mxu0 0.0
    %v1037 = vand.u32 %v789, 4294901760
    %v1038 = vsub.f32 %v789, %v1037
    %1039 = vmatmul.mubr.f32.gmra.mrb[0].mxu0 %v1038
    %v1040 = vpop.f32.mrb[0].mxu0
    %v1041 = vadd.f32 %v959, %v1040
    %v1042 = vpop.f32.mrb[0].mxu0
    %1043 = vmatprep.mubr.f32.mxu0 0.0
    %v1044 = vand.u32 %v792, 4294901760
    %v1045 = vsub.f32 %v792, %v1044
    %1046 = vmatmul.mubr.f32.gmra.mrb[0].mxu0 %v1045
    %v1047 = vpop.f32.mrb[0].mxu0
    %v1048 = vadd.f32 %v965, %v1047
    %v1049 = vpop.f32.mrb[0].mxu0
    %1050 = vdwg.mxu0
    %1051 = vmatprep.subr.mxu0 0.0
    %v1052 = vand.u32 %v753, 4294901760
    %1053 = vmatpush1.msra.mxu0 %v1052
    %1054 = vmatprep.subr.mxu0 0.0
    %v1055 = vand.u32 %v759, 4294901760
    %1056 = vmatpush1.msra.mxu0 %v1055
    %1057 = vmatprep.subr.mxu0 0.0
    %1058 = vmatpush1.msra.mxu0 0.0
    %1059 = vmatprep.subr.mxu0 0.0
    %1060 = vmatpush1.msra.mxu0 0.0
    %1061 = vmatprep.subr.mxu0 0.0
    %1062 = vmatpush1.msra.mxu0 0.0
    %1063 = vmatprep.subr.mxu0 0.0
    %1064 = vmatpush1.msra.mxu0 0.0
    %1065 = vmatprep.subr.mxu0 0.0
    %1066 = vmatpush1.msra.mxu0 0.0
    %1067 = vmatprep.subr.mxu0 0.0
    %1068 = vmatpush1.msra.mxu0 0.0
    %1069 = vmatprep.subr.mxu0 0.0
    %1070 = vmatpush1.msra.mxu0 0.0
    %1071 = vmatprep.subr.mxu0 0.0
    %1072 = vmatpush1.msra.mxu0 0.0
    %1073 = vmatprep.subr.mxu0 0.0
    %1074 = vmatpush1.msra.mxu0 0.0
    %1075 = vmatprep.subr.mxu0 0.0
    %1076 = vmatpush1.msra.mxu0 0.0
    %1077 = vmatprep.subr.mxu0 0.0
    %1078 = vmatpush1.msra.mxu0 0.0
    %1079 = vmatprep.subr.mxu0 0.0
    %1080 = vmatpush1.msra.mxu0 0.0
    %1081 = vmatprep.subr.mxu0 0.0
    %1082 = vmatpush1.msra.mxu0 0.0
    %1083 = vmatprep.subr.mxu0 0.0
    %1084 = vmatpush1.msra.mxu0 0.0
    %1085 = vmatprep.subr.mxu0 0.0
    %1086 = vmatpush1.msra.mxu0 0.0
    %1087 = vmatprep.subr.mxu0 0.0
    %1088 = vmatpush1.msra.mxu0 0.0
    %1089 = vmatprep.subr.mxu0 0.0
    %1090 = vmatpush1.msra.mxu0 0.0
    %1091 = vmatprep.subr.mxu0 0.0
    %1092 = vmatpush1.msra.mxu0 0.0
    %1093 = vmatprep.subr.mxu0 0.0
    %1094 = vmatpush1.msra.mxu0 0.0
    %1095 = vmatprep.subr.mxu0 0.0
    %1096 = vmatpush1.msra.mxu0 0.0
    %1097 = vmatprep.subr.mxu0 0.0
    %1098 = vmatpush1.msra.mxu0 0.0
    %1099 = vmatprep.subr.mxu0 0.0
    %1100 = vmatpush1.msra.mxu0 0.0
    %1101 = vmatprep.subr.mxu0 0.0
    %1102 = vmatpush1.msra.mxu0 0.0
    %1103 = vmatprep.subr.mxu0 0.0
    %1104 = vmatpush1.msra.mxu0 0.0
    %1105 = vmatprep.subr.mxu0 0.0
    %1106 = vmatpush1.msra.mxu0 0.0
    %1107 = vmatprep.subr.mxu0 0.0
    %1108 = vmatpush1.msra.mxu0 0.0
    %1109 = vmatprep.subr.mxu0 0.0
    %1110 = vmatpush1.msra.mxu0 0.0
    %1111 = vmatprep.subr.mxu0 0.0
    %1112 = vmatpush1.msra.mxu0 0.0
    %1113 = vmatprep.subr.mxu0 0.0
    %1114 = vmatpush1.msra.mxu0 0.0
    %1115 = vmatprep.subr.mxu0 0.0
    %1116 = vmatpush1.msra.mxu0 0.0
    %1117 = vmatprep.mubr.f32.mxu0 0.0
    %v1118 = vand.u32 %v789, 4294901760
    %v1119 = vsub.f32 %v789, %v1118
    %v1120 = vand.u32 %v1119, 4294901760
    %1121 = vmatmul.mubr.f32.gmra.mrb[0].mxu0 %v1120
    %v1122 = vpop.f32.mrb[0].mxu0
    %v1123 = vadd.f32 %v1041, %v1122
    %v1124 = vpop.f32.mrb[0].mxu0
    %1125 = vmatprep.mubr.f32.mxu0 0.0
    %v1126 = vand.u32 %v792, 4294901760
    %v1127 = vsub.f32 %v792, %v1126
    %v1128 = vand.u32 %v1127, 4294901760
    %1129 = vmatmul.mubr.f32.gmra.mrb[0].mxu0 %v1128
    %v1130 = vpop.f32.mrb[0].mxu0
    %v1131 = vadd.f32 %v1048, %v1130
    %v1132 = vpop.f32.mrb[0].mxu0
    %1133 = vdwg.mxu0
    %1134 = vmatprep.subr.mxu0 0.0
    %v1135 = vand.u32 %v753, 4294901760
    %v1136 = vsub.f32 %v753, %v1135
    %v1137 = vand.u32 %v1136, 4294901760
    %1138 = vmatpush1.msra.mxu0 %v1137
    %1139 = vmatprep.subr.mxu0 0.0
    %v1140 = vand.u32 %v759, 4294901760
    %v1141 = vsub.f32 %v759, %v1140
    %v1142 = vand.u32 %v1141, 4294901760
    %1143 = vmatpush1.msra.mxu0 %v1142
    %1144 = vmatprep.subr.mxu0 0.0
    %1145 = vmatpush1.msra.mxu0 0.0
    %1146 = vmatprep.subr.mxu0 0.0
    %1147 = vmatpush1.msra.mxu0 0.0
    %1148 = vmatprep.subr.mxu0 0.0
    %1149 = vmatpush1.msra.mxu0 0.0
    %1150 = vmatprep.subr.mxu0 0.0
    %1151 = vmatpush1.msra.mxu0 0.0
    %1152 = vmatprep.subr.mxu0 0.0
    %1153 = vmatpush1.msra.mxu0 0.0
    %1154 = vmatprep.subr.mxu0 0.0
    %1155 = vmatpush1.msra.mxu0 0.0
    %1156 = vmatprep.subr.mxu0 0.0
    %1157 = vmatpush1.msra.mxu0 0.0
    %1158 = vmatprep.subr.mxu0 0.0
    %1159 = vmatpush1.msra.mxu0 0.0
    %1160 = vmatprep.subr.mxu0 0.0
    %1161 = vmatpush1.msra.mxu0 0.0
    %1162 = vmatprep.subr.mxu0 0.0
    %1163 = vmatpush1.msra.mxu0 0.0
    %1164 = vmatprep.subr.mxu0 0.0
    %1165 = vmatpush1.msra.mxu0 0.0
    %1166 = vmatprep.subr.mxu0 0.0
    %1167 = vmatpush1.msra.mxu0 0.0
    %1168 = vmatprep.subr.mxu0 0.0
    %1169 = vmatpush1.msra.mxu0 0.0
    %1170 = vmatprep.subr.mxu0 0.0
    %1171 = vmatpush1.msra.mxu0 0.0
    %1172 = vmatprep.subr.mxu0 0.0
    %1173 = vmatpush1.msra.mxu0 0.0
    %1174 = vmatprep.subr.mxu0 0.0
    %1175 = vmatpush1.msra.mxu0 0.0
    %1176 = vmatprep.subr.mxu0 0.0
    %1177 = vmatpush1.msra.mxu0 0.0
    %1178 = vmatprep.subr.mxu0 0.0
    %1179 = vmatpush1.msra.mxu0 0.0
    %1180 = vmatprep.subr.mxu0 0.0
    %1181 = vmatpush1.msra.mxu0 0.0
    %1182 = vmatprep.subr.mxu0 0.0
    %1183 = vmatpush1.msra.mxu0 0.0
    %1184 = vmatprep.subr.mxu0 0.0
    %1185 = vmatpush1.msra.mxu0 0.0
    %1186 = vmatprep.subr.mxu0 0.0
    %1187 = vmatpush1.msra.mxu0 0.0
    %1188 = vmatprep.subr.mxu0 0.0
    %1189 = vmatpush1.msra.mxu0 0.0
    %1190 = vmatprep.subr.mxu0 0.0
    %1191 = vmatpush1.msra.mxu0 0.0
    %1192 = vmatprep.subr.mxu0 0.0
    %1193 = vmatpush1.msra.mxu0 0.0
    %1194 = vmatprep.subr.mxu0 0.0
    %1195 = vmatpush1.msra.mxu0 0.0
    %1196 = vmatprep.subr.mxu0 0.0
    %1197 = vmatpush1.msra.mxu0 0.0
    %1198 = vmatprep.subr.mxu0 0.0
    %1199 = vmatpush1.msra.mxu0 0.0
    %1200 = vmatprep.subr.mxu0 0.0
    %1201 = vmatpush1.msra.mxu0 0.0
    %1202 = vmatprep.subr.mxu0 0.0
    %1203 = vmatpush1.msra.mxu0 0.0
    %1204 = vmatprep.mubr.f32.mxu0 0.0
    %v1205 = vand.u32 %v789, 4294901760
    %1206 = vmatmul.mubr.f32.gmra.mrb[0].mxu0 %v1205
    %v1207 = vpop.f32.mrb[0].mxu0
    %v1208 = vadd.f32 %v1123, %v1207
    %v1209 = vpop.f32.mrb[0].mxu0
    %1210 = vmatprep.mubr.f32.mxu0 0.0
    %v1211 = vand.u32 %v792, 4294901760
    %1212 = vmatmul.mubr.f32.gmra.mrb[0].mxu0 %v1211
    %v1213 = vpop.f32.mrb[0].mxu0
    %v1214 = vadd.f32 %v1131, %v1213
    %v1215 = vpop.f32.mrb[0].mxu0
    %1216 = vdwg.mxu0
    %1217 = vmatprep.subr.mxu0 0.0
    %v1218 = vand.u32 %v753, 4294901760
    %1219 = vmatpush1.msra.mxu0 %v1218
    %1220 = vmatprep.subr.mxu0 0.0
    %v1221 = vand.u32 %v759, 4294901760
    %1222 = vmatpush1.msra.mxu0 %v1221
    %1223 = vmatprep.subr.mxu0 0.0
    %1224 = vmatpush1.msra.mxu0 0.0
    %1225 = vmatprep.subr.mxu0 0.0
    %1226 = vmatpush1.msra.mxu0 0.0
    %1227 = vmatprep.subr.mxu0 0.0
    %1228 = vmatpush1.msra.mxu0 0.0
    %1229 = vmatprep.subr.mxu0 0.0
    %1230 = vmatpush1.msra.mxu0 0.0
    %1231 = vmatprep.subr.mxu0 0.0
    %1232 = vmatpush1.msra.mxu0 0.0
    %1233 = vmatprep.subr.mxu0 0.0
    %1234 = vmatpush1.msra.mxu0 0.0
    %1235 = vmatprep.subr.mxu0 0.0
    %1236 = vmatpush1.msra.mxu0 0.0
    %1237 = vmatprep.subr.mxu0 0.0
    %1238 = vmatpush1.msra.mxu0 0.0
    %1239 = vmatprep.subr.mxu0 0.0
    %1240 = vmatpush1.msra.mxu0 0.0
    %1241 = vmatprep.subr.mxu0 0.0
    %1242 = vmatpush1.msra.mxu0 0.0
    %1243 = vmatprep.subr.mxu0 0.0
    %1244 = vmatpush1.msra.mxu0 0.0
    %1245 = vmatprep.subr.mxu0 0.0
    %1246 = vmatpush1.msra.mxu0 0.0
    %1247 = vmatprep.subr.mxu0 0.0
    %1248 = vmatpush1.msra.mxu0 0.0
    %1249 = vmatprep.subr.mxu0 0.0
    %1250 = vmatpush1.msra.mxu0 0.0
    %1251 = vmatprep.subr.mxu0 0.0
    %1252 = vmatpush1.msra.mxu0 0.0
    %1253 = vmatprep.subr.mxu0 0.0
    %1254 = vmatpush1.msra.mxu0 0.0
    %1255 = vmatprep.subr.mxu0 0.0
    %1256 = vmatpush1.msra.mxu0 0.0
    %1257 = vmatprep.subr.mxu0 0.0
    %1258 = vmatpush1.msra.mxu0 0.0
    %1259 = vmatprep.subr.mxu0 0.0
    %1260 = vmatpush1.msra.mxu0 0.0
    %1261 = vmatprep.subr.mxu0 0.0
    %1262 = vmatpush1.msra.mxu0 0.0
    %1263 = vmatprep.subr.mxu0 0.0
    %1264 = vmatpush1.msra.mxu0 0.0
    %1265 = vmatprep.subr.mxu0 0.0
    %1266 = vmatpush1.msra.mxu0 0.0
    %1267 = vmatprep.subr.mxu0 0.0
    %1268 = vmatpush1.msra.mxu0 0.0
    %1269 = vmatprep.subr.mxu0 0.0
    %1270 = vmatpush1.msra.mxu0 0.0
    %1271 = vmatprep.subr.mxu0 0.0
    %1272 = vmatpush1.msra.mxu0 0.0
    %1273 = vmatprep.subr.mxu0 0.0
    %1274 = vmatpush1.msra.mxu0 0.0
    %1275 = vmatprep.subr.mxu0 0.0
    %1276 = vmatpush1.msra.mxu0 0.0
    %1277 = vmatprep.subr.mxu0 0.0
    %1278 = vmatpush1.msra.mxu0 0.0
    %1279 = vmatprep.subr.mxu0 0.0
    %1280 = vmatpush1.msra.mxu0 0.0
    %1281 = vmatprep.subr.mxu0 0.0
    %1282 = vmatpush1.msra.mxu0 0.0
    %1283 = vmatprep.mubr.f32.mxu0 0.0
    %v1284 = vand.u32 %v789, 4294901760
    %1285 = vmatmul.mubr.f32.gmra.mrb[0].mxu0 %v1284
    %v1286 = vpop.f32.mrb[0].mxu0
    %v1287 = vadd.f32 %v1208, %v1286
    %v1288 = vpop.f32.mrb[0].mxu0
    %1289 = vmatprep.mubr.f32.mxu0 0.0
    %v1290 = vand.u32 %v792, 4294901760
    %1291 = vmatmul.mubr.f32.gmra.mrb[0].mxu0 %v1290
    %v1292 = vpop.f32.mrb[0].mxu0
    %v1293 = vadd.f32 %v1214, %v1292
    %v1294 = vpop.f32.mrb[0].mxu0
    %1295 = vdwg.mxu0
    %v1296 = vmul.f32 %v753, %v1287
    %v1297 = vmul.f32 %v759, %v1293
    %vm1298 = vcmp.lt.s32.totalorder %v763, 4
    %vm1299 = vcmp.ge.s32.totalorder %v763, 8
    %vm1300 = vcmp.lt.s32.totalorder %v763, 12
    %vm1301 = vmand %vm1299, %vm1300
    %vm1302 = vcmp.eq.s32.totalorder %v41, 0
    %vm1303 = vmand %vm1302, %vm1298
    %vm1304 = vcmp.eq.s32.totalorder %v41, 1
    %vm1305 = vmand %vm1304, %vm1301
    %vm1306 = vmor %vm1303, %vm1305
    %vm1307 = vcmp.eq.s32.totalorder %v41, 2
    %vm1308 = vmor %vm1298, %vm1301
    %vm1309 = vmand %vm1307, %vm1308
    %vm1310 = vmor %vm1306, %vm1309
    %v1311 = vsel %vm1310, 1, 0
    %v1312 = vcvt.s32.f32 %v1311
    %v1314 = vsel %vm787, %v1312, 0
    %1316 = vmatprep.subr.mxu0 0.0
    %v1317 = vand.u32 %v1296, 4294901760
    %1318 = vmatpush1.msra.mxu0 %v1317
    %1319 = vmatprep.subr.mxu0 0.0
    %v1320 = vand.u32 %v1297, 4294901760
    %1321 = vmatpush1.msra.mxu0 %v1320
    %1322 = vmatprep.subr.mxu0 0.0
    %1323 = vmatpush1.msra.mxu0 0.0
    %1324 = vmatprep.subr.mxu0 0.0
    %1325 = vmatpush1.msra.mxu0 0.0
    %1326 = vmatprep.subr.mxu0 0.0
    %1327 = vmatpush1.msra.mxu0 0.0
    %1328 = vmatprep.subr.mxu0 0.0
    %1329 = vmatpush1.msra.mxu0 0.0
    %1330 = vmatprep.subr.mxu0 0.0
    %1331 = vmatpush1.msra.mxu0 0.0
    %1332 = vmatprep.subr.mxu0 0.0
    %1333 = vmatpush1.msra.mxu0 0.0
    %1334 = vmatprep.subr.mxu0 0.0
    %1335 = vmatpush1.msra.mxu0 0.0
    %1336 = vmatprep.subr.mxu0 0.0
    %1337 = vmatpush1.msra.mxu0 0.0
    %1338 = vmatprep.subr.mxu0 0.0
    %1339 = vmatpush1.msra.mxu0 0.0
    %1340 = vmatprep.subr.mxu0 0.0
    %1341 = vmatpush1.msra.mxu0 0.0
    %1342 = vmatprep.subr.mxu0 0.0
    %1343 = vmatpush1.msra.mxu0 0.0
    %1344 = vmatprep.subr.mxu0 0.0
    %1345 = vmatpush1.msra.mxu0 0.0
    %1346 = vmatprep.subr.mxu0 0.0
    %1347 = vmatpush1.msra.mxu0 0.0
    %1348 = vmatprep.subr.mxu0 0.0
    %1349 = vmatpush1.msra.mxu0 0.0
    %1350 = vmatprep.subr.mxu0 0.0
    %1351 = vmatpush1.msra.mxu0 0.0
    %1352 = vmatprep.subr.mxu0 0.0
    %1353 = vmatpush1.msra.mxu0 0.0
    %1354 = vmatprep.subr.mxu0 0.0
    %1355 = vmatpush1.msra.mxu0 0.0
    %1356 = vmatprep.subr.mxu0 0.0
    %1357 = vmatpush1.msra.mxu0 0.0
    %1358 = vmatprep.subr.mxu0 0.0
    %1359 = vmatpush1.msra.mxu0 0.0
    %1360 = vmatprep.subr.mxu0 0.0
    %1361 = vmatpush1.msra.mxu0 0.0
    %1362 = vmatprep.subr.mxu0 0.0
    %1363 = vmatpush1.msra.mxu0 0.0
    %1364 = vmatprep.subr.mxu0 0.0
    %1365 = vmatpush1.msra.mxu0 0.0
    %1366 = vmatprep.subr.mxu0 0.0
    %1367 = vmatpush1.msra.mxu0 0.0
    %1368 = vmatprep.subr.mxu0 0.0
    %1369 = vmatpush1.msra.mxu0 0.0
    %1370 = vmatprep.subr.mxu0 0.0
    %1371 = vmatpush1.msra.mxu0 0.0
    %1372 = vmatprep.subr.mxu0 0.0
    %1373 = vmatpush1.msra.mxu0 0.0
    %1374 = vmatprep.subr.mxu0 0.0
    %1375 = vmatpush1.msra.mxu0 0.0
    %1376 = vmatprep.subr.mxu0 0.0
    %1377 = vmatpush1.msra.mxu0 0.0
    %1378 = vmatprep.subr.mxu0 0.0
    %1379 = vmatpush1.msra.mxu0 0.0
    %1380 = vmatprep.subr.mxu0 0.0
    %1381 = vmatpush1.msra.mxu0 0.0
    %1382 = vmatprep.mubr.f32.mxu0 0.0
    %v1383 = vand.u32 %v1314, 4294901760
    %v1384 = vsub.f32 %v1314, %v1383
    %v1385 = vand.u32 %v1384, 4294901760
    %v1386 = vsub.f32 %v1384, %v1385
    %v1387 = vand.u32 %v1386, 4294901760
    %1388 = vmatmul.mubr.f32.gmra.mrb[0].mxu0 %v1387
    %v1389 = vpop.f32.mrb[0].mxu0
    %v1390 = vadd.f32 0.0, %v1389
    %v1391 = vpop.f32.mrb[0].mxu0
    %1392 = vdwg.mxu0
    %1393 = vmatprep.subr.mxu0 0.0
    %v1394 = vand.u32 %v1296, 4294901760
    %v1395 = vsub.f32 %v1296, %v1394
    %v1396 = vand.u32 %v1395, 4294901760
    %v1397 = vsub.f32 %v1395, %v1396
    %v1398 = vand.u32 %v1397, 4294901760
    %1399 = vmatpush1.msra.mxu0 %v1398
    %1400 = vmatprep.subr.mxu0 0.0
    %v1401 = vand.u32 %v1297, 4294901760
    %v1402 = vsub.f32 %v1297, %v1401
    %v1403 = vand.u32 %v1402, 4294901760
    %v1404 = vsub.f32 %v1402, %v1403
    %v1405 = vand.u32 %v1404, 4294901760
    %1406 = vmatpush1.msra.mxu0 %v1405
    %1407 = vmatprep.subr.mxu0 0.0
    %1408 = vmatpush1.msra.mxu0 0.0
    %1409 = vmatprep.subr.mxu0 0.0
    %1410 = vmatpush1.msra.mxu0 0.0
    %1411 = vmatprep.subr.mxu0 0.0
    %1412 = vmatpush1.msra.mxu0 0.0
    %1413 = vmatprep.subr.mxu0 0.0
    %1414 = vmatpush1.msra.mxu0 0.0
    %1415 = vmatprep.subr.mxu0 0.0
    %1416 = vmatpush1.msra.mxu0 0.0
    %1417 = vmatprep.subr.mxu0 0.0
    %1418 = vmatpush1.msra.mxu0 0.0
    %1419 = vmatprep.subr.mxu0 0.0
    %1420 = vmatpush1.msra.mxu0 0.0
    %1421 = vmatprep.subr.mxu0 0.0
    %1422 = vmatpush1.msra.mxu0 0.0
    %1423 = vmatprep.subr.mxu0 0.0
    %1424 = vmatpush1.msra.mxu0 0.0
    %1425 = vmatprep.subr.mxu0 0.0
    %1426 = vmatpush1.msra.mxu0 0.0
    %1427 = vmatprep.subr.mxu0 0.0
    %1428 = vmatpush1.msra.mxu0 0.0
    %1429 = vmatprep.subr.mxu0 0.0
    %1430 = vmatpush1.msra.mxu0 0.0
    %1431 = vmatprep.subr.mxu0 0.0
    %1432 = vmatpush1.msra.mxu0 0.0
    %1433 = vmatprep.subr.mxu0 0.0
    %1434 = vmatpush1.msra.mxu0 0.0
    %1435 = vmatprep.subr.mxu0 0.0
    %1436 = vmatpush1.msra.mxu0 0.0
    %1437 = vmatprep.subr.mxu0 0.0
    %1438 = vmatpush1.msra.mxu0 0.0
    %1439 = vmatprep.subr.mxu0 0.0
    %1440 = vmatpush1.msra.mxu0 0.0
    %1441 = vmatprep.subr.mxu0 0.0
    %1442 = vmatpush1.msra.mxu0 0.0
    %1443 = vmatprep.subr.mxu0 0.0
    %1444 = vmatpush1.msra.mxu0 0.0
    %1445 = vmatprep.subr.mxu0 0.0
    %1446 = vmatpush1.msra.mxu0 0.0
    %1447 = vmatprep.subr.mxu0 0.0
    %1448 = vmatpush1.msra.mxu0 0.0
    %1449 = vmatprep.subr.mxu0 0.0
    %1450 = vmatpush1.msra.mxu0 0.0
    %1451 = vmatprep.subr.mxu0 0.0
    %1452 = vmatpush1.msra.mxu0 0.0
    %1453 = vmatprep.subr.mxu0 0.0
    %1454 = vmatpush1.msra.mxu0 0.0
    %1455 = vmatprep.subr.mxu0 0.0
    %1456 = vmatpush1.msra.mxu0 0.0
    %1457 = vmatprep.subr.mxu0 0.0
    %1458 = vmatpush1.msra.mxu0 0.0
    %1459 = vmatprep.subr.mxu0 0.0
    %1460 = vmatpush1.msra.mxu0 0.0
    %1461 = vmatprep.subr.mxu0 0.0
    %1462 = vmatpush1.msra.mxu0 0.0
    %1463 = vmatprep.subr.mxu0 0.0
    %1464 = vmatpush1.msra.mxu0 0.0
    %1465 = vmatprep.subr.mxu0 0.0
    %1466 = vmatpush1.msra.mxu0 0.0
    %1467 = vmatprep.mubr.f32.mxu0 0.0
    %v1468 = vand.u32 %v1314, 4294901760
    %1469 = vmatmul.mubr.f32.gmra.mrb[0].mxu0 %v1468
    %v1470 = vpop.f32.mrb[0].mxu0
    %v1471 = vadd.f32 %v1390, %v1470
    %v1472 = vpop.f32.mrb[0].mxu0
    %1473 = vdwg.mxu0
    %1474 = vmatprep.subr.mxu0 0.0
    %v1475 = vand.u32 %v1296, 4294901760
    %v1476 = vsub.f32 %v1296, %v1475
    %1477 = vmatpush1.msra.mxu0 %v1476
    %1478 = vmatprep.subr.mxu0 0.0
    %v1479 = vand.u32 %v1297, 4294901760
    %v1480 = vsub.f32 %v1297, %v1479
    %1481 = vmatpush1.msra.mxu0 %v1480
    %1482 = vmatprep.subr.mxu0 0.0
    %1483 = vmatpush1.msra.mxu0 0.0
    %1484 = vmatprep.subr.mxu0 0.0
    %1485 = vmatpush1.msra.mxu0 0.0
    %1486 = vmatprep.subr.mxu0 0.0
    %1487 = vmatpush1.msra.mxu0 0.0
    %1488 = vmatprep.subr.mxu0 0.0
    %1489 = vmatpush1.msra.mxu0 0.0
    %1490 = vmatprep.subr.mxu0 0.0
    %1491 = vmatpush1.msra.mxu0 0.0
    %1492 = vmatprep.subr.mxu0 0.0
    %1493 = vmatpush1.msra.mxu0 0.0
    %1494 = vmatprep.subr.mxu0 0.0
    %1495 = vmatpush1.msra.mxu0 0.0
    %1496 = vmatprep.subr.mxu0 0.0
    %1497 = vmatpush1.msra.mxu0 0.0
    %1498 = vmatprep.subr.mxu0 0.0
    %1499 = vmatpush1.msra.mxu0 0.0
    %1500 = vmatprep.subr.mxu0 0.0
    %1501 = vmatpush1.msra.mxu0 0.0
    %1502 = vmatprep.subr.mxu0 0.0
    %1503 = vmatpush1.msra.mxu0 0.0
    %1504 = vmatprep.subr.mxu0 0.0
    %1505 = vmatpush1.msra.mxu0 0.0
    %1506 = vmatprep.subr.mxu0 0.0
    %1507 = vmatpush1.msra.mxu0 0.0
    %1508 = vmatprep.subr.mxu0 0.0
    %1509 = vmatpush1.msra.mxu0 0.0
    %1510 = vmatprep.subr.mxu0 0.0
    %1511 = vmatpush1.msra.mxu0 0.0
    %1512 = vmatprep.subr.mxu0 0.0
    %1513 = vmatpush1.msra.mxu0 0.0
    %1514 = vmatprep.subr.mxu0 0.0
    %1515 = vmatpush1.msra.mxu0 0.0
    %1516 = vmatprep.subr.mxu0 0.0
    %1517 = vmatpush1.msra.mxu0 0.0
    %1518 = vmatprep.subr.mxu0 0.0
    %1519 = vmatpush1.msra.mxu0 0.0
    %1520 = vmatprep.subr.mxu0 0.0
    %1521 = vmatpush1.msra.mxu0 0.0
    %1522 = vmatprep.subr.mxu0 0.0
    %1523 = vmatpush1.msra.mxu0 0.0
    %1524 = vmatprep.subr.mxu0 0.0
    %1525 = vmatpush1.msra.mxu0 0.0
    %1526 = vmatprep.subr.mxu0 0.0
    %1527 = vmatpush1.msra.mxu0 0.0
    %1528 = vmatprep.subr.mxu0 0.0
    %1529 = vmatpush1.msra.mxu0 0.0
    %1530 = vmatprep.subr.mxu0 0.0
    %1531 = vmatpush1.msra.mxu0 0.0
    %1532 = vmatprep.subr.mxu0 0.0
    %1533 = vmatpush1.msra.mxu0 0.0
    %1534 = vmatprep.subr.mxu0 0.0
    %1535 = vmatpush1.msra.mxu0 0.0
    %1536 = vmatprep.subr.mxu0 0.0
    %1537 = vmatpush1.msra.mxu0 0.0
    %1538 = vmatprep.subr.mxu0 0.0
    %1539 = vmatpush1.msra.mxu0 0.0
    %1540 = vmatprep.subr.mxu0 0.0
    %1541 = vmatpush1.msra.mxu0 0.0
    %1542 = vmatprep.mubr.f32.mxu0 0.0
    %v1543 = vand.u32 %v1314, 4294901760
    %v1544 = vsub.f32 %v1314, %v1543
    %1545 = vmatmul.mubr.f32.gmra.mrb[0].mxu0 %v1544
    %v1546 = vpop.f32.mrb[0].mxu0
    %v1547 = vadd.f32 %v1471, %v1546
    %v1548 = vpop.f32.mrb[0].mxu0
    %1549 = vdwg.mxu0
    %1550 = vmatprep.subr.mxu0 0.0
    %v1551 = vand.u32 %v1296, 4294901760
    %1552 = vmatpush1.msra.mxu0 %v1551
    %1553 = vmatprep.subr.mxu0 0.0
    %v1554 = vand.u32 %v1297, 4294901760
    %1555 = vmatpush1.msra.mxu0 %v1554
    %1556 = vmatprep.subr.mxu0 0.0
    %1557 = vmatpush1.msra.mxu0 0.0
    %1558 = vmatprep.subr.mxu0 0.0
    %1559 = vmatpush1.msra.mxu0 0.0
    %1560 = vmatprep.subr.mxu0 0.0
    %1561 = vmatpush1.msra.mxu0 0.0
    %1562 = vmatprep.subr.mxu0 0.0
    %1563 = vmatpush1.msra.mxu0 0.0
    %1564 = vmatprep.subr.mxu0 0.0
    %1565 = vmatpush1.msra.mxu0 0.0
    %1566 = vmatprep.subr.mxu0 0.0
    %1567 = vmatpush1.msra.mxu0 0.0
    %1568 = vmatprep.subr.mxu0 0.0
    %1569 = vmatpush1.msra.mxu0 0.0
    %1570 = vmatprep.subr.mxu0 0.0
    %1571 = vmatpush1.msra.mxu0 0.0
    %1572 = vmatprep.subr.mxu0 0.0
    %1573 = vmatpush1.msra.mxu0 0.0
    %1574 = vmatprep.subr.mxu0 0.0
    %1575 = vmatpush1.msra.mxu0 0.0
    %1576 = vmatprep.subr.mxu0 0.0
    %1577 = vmatpush1.msra.mxu0 0.0
    %1578 = vmatprep.subr.mxu0 0.0
    %1579 = vmatpush1.msra.mxu0 0.0
    %1580 = vmatprep.subr.mxu0 0.0
    %1581 = vmatpush1.msra.mxu0 0.0
    %1582 = vmatprep.subr.mxu0 0.0
    %1583 = vmatpush1.msra.mxu0 0.0
    %1584 = vmatprep.subr.mxu0 0.0
    %1585 = vmatpush1.msra.mxu0 0.0
    %1586 = vmatprep.subr.mxu0 0.0
    %1587 = vmatpush1.msra.mxu0 0.0
    %1588 = vmatprep.subr.mxu0 0.0
    %1589 = vmatpush1.msra.mxu0 0.0
    %1590 = vmatprep.subr.mxu0 0.0
    %1591 = vmatpush1.msra.mxu0 0.0
    %1592 = vmatprep.subr.mxu0 0.0
    %1593 = vmatpush1.msra.mxu0 0.0
    %1594 = vmatprep.subr.mxu0 0.0
    %1595 = vmatpush1.msra.mxu0 0.0
    %1596 = vmatprep.subr.mxu0 0.0
    %1597 = vmatpush1.msra.mxu0 0.0
    %1598 = vmatprep.subr.mxu0 0.0
    %1599 = vmatpush1.msra.mxu0 0.0
    %1600 = vmatprep.subr.mxu0 0.0
    %1601 = vmatpush1.msra.mxu0 0.0
    %1602 = vmatprep.subr.mxu0 0.0
    %1603 = vmatpush1.msra.mxu0 0.0
    %1604 = vmatprep.subr.mxu0 0.0
    %1605 = vmatpush1.msra.mxu0 0.0
    %1606 = vmatprep.subr.mxu0 0.0
    %1607 = vmatpush1.msra.mxu0 0.0
    %1608 = vmatprep.subr.mxu0 0.0
    %1609 = vmatpush1.msra.mxu0 0.0
    %1610 = vmatprep.subr.mxu0 0.0
    %1611 = vmatpush1.msra.mxu0 0.0
    %1612 = vmatprep.subr.mxu0 0.0
    %1613 = vmatpush1.msra.mxu0 0.0
    %1614 = vmatprep.subr.mxu0 0.0
    %1615 = vmatpush1.msra.mxu0 0.0
    %1616 = vmatprep.mubr.f32.mxu0 0.0
    %v1617 = vand.u32 %v1314, 4294901760
    %v1618 = vsub.f32 %v1314, %v1617
    %v1619 = vand.u32 %v1618, 4294901760
    %1620 = vmatmul.mubr.f32.gmra.mrb[0].mxu0 %v1619
    %v1621 = vpop.f32.mrb[0].mxu0
    %v1622 = vadd.f32 %v1547, %v1621
    %v1623 = vpop.f32.mrb[0].mxu0
    %1624 = vdwg.mxu0
    %1625 = vmatprep.subr.mxu0 0.0
    %v1626 = vand.u32 %v1296, 4294901760
    %v1627 = vsub.f32 %v1296, %v1626
    %v1628 = vand.u32 %v1627, 4294901760
    %1629 = vmatpush1.msra.mxu0 %v1628
    %1630 = vmatprep.subr.mxu0 0.0
    %v1631 = vand.u32 %v1297, 4294901760
    %v1632 = vsub.f32 %v1297, %v1631
    %v1633 = vand.u32 %v1632, 4294901760
    %1634 = vmatpush1.msra.mxu0 %v1633
    %1635 = vmatprep.subr.mxu0 0.0
    %1636 = vmatpush1.msra.mxu0 0.0
    %1637 = vmatprep.subr.mxu0 0.0
    %1638 = vmatpush1.msra.mxu0 0.0
    %1639 = vmatprep.subr.mxu0 0.0
    %1640 = vmatpush1.msra.mxu0 0.0
    %1641 = vmatprep.subr.mxu0 0.0
    %1642 = vmatpush1.msra.mxu0 0.0
    %1643 = vmatprep.subr.mxu0 0.0
    %1644 = vmatpush1.msra.mxu0 0.0
    %1645 = vmatprep.subr.mxu0 0.0
    %1646 = vmatpush1.msra.mxu0 0.0
    %1647 = vmatprep.subr.mxu0 0.0
    %1648 = vmatpush1.msra.mxu0 0.0
    %1649 = vmatprep.subr.mxu0 0.0
    %1650 = vmatpush1.msra.mxu0 0.0
    %1651 = vmatprep.subr.mxu0 0.0
    %1652 = vmatpush1.msra.mxu0 0.0
    %1653 = vmatprep.subr.mxu0 0.0
    %1654 = vmatpush1.msra.mxu0 0.0
    %1655 = vmatprep.subr.mxu0 0.0
    %1656 = vmatpush1.msra.mxu0 0.0
    %1657 = vmatprep.subr.mxu0 0.0
    %1658 = vmatpush1.msra.mxu0 0.0
    %1659 = vmatprep.subr.mxu0 0.0
    %1660 = vmatpush1.msra.mxu0 0.0
    %1661 = vmatprep.subr.mxu0 0.0
    %1662 = vmatpush1.msra.mxu0 0.0
    %1663 = vmatprep.subr.mxu0 0.0
    %1664 = vmatpush1.msra.mxu0 0.0
    %1665 = vmatprep.subr.mxu0 0.0
    %1666 = vmatpush1.msra.mxu0 0.0
    %1667 = vmatprep.subr.mxu0 0.0
    %1668 = vmatpush1.msra.mxu0 0.0
    %1669 = vmatprep.subr.mxu0 0.0
    %1670 = vmatpush1.msra.mxu0 0.0
    %1671 = vmatprep.subr.mxu0 0.0
    %1672 = vmatpush1.msra.mxu0 0.0
    %1673 = vmatprep.subr.mxu0 0.0
    %1674 = vmatpush1.msra.mxu0 0.0
    %1675 = vmatprep.subr.mxu0 0.0
    %1676 = vmatpush1.msra.mxu0 0.0
    %1677 = vmatprep.subr.mxu0 0.0
    %1678 = vmatpush1.msra.mxu0 0.0
    %1679 = vmatprep.subr.mxu0 0.0
    %1680 = vmatpush1.msra.mxu0 0.0
    %1681 = vmatprep.subr.mxu0 0.0
    %1682 = vmatpush1.msra.mxu0 0.0
    %1683 = vmatprep.subr.mxu0 0.0
    %1684 = vmatpush1.msra.mxu0 0.0
    %1685 = vmatprep.subr.mxu0 0.0
    %1686 = vmatpush1.msra.mxu0 0.0
    %1687 = vmatprep.subr.mxu0 0.0
    %1688 = vmatpush1.msra.mxu0 0.0
    %1689 = vmatprep.subr.mxu0 0.0
    %1690 = vmatpush1.msra.mxu0 0.0
    %1691 = vmatprep.subr.mxu0 0.0
    %1692 = vmatpush1.msra.mxu0 0.0
    %1693 = vmatprep.subr.mxu0 0.0
    %1694 = vmatpush1.msra.mxu0 0.0
    %1695 = vmatprep.mubr.f32.mxu0 0.0
    %v1696 = vand.u32 %v1314, 4294901760
    %1697 = vmatmul.mubr.f32.gmra.mrb[0].mxu0 %v1696
    %v1698 = vpop.f32.mrb[0].mxu0
    %v1699 = vadd.f32 %v1622, %v1698
    %v1700 = vpop.f32.mrb[0].mxu0
    %1701 = vdwg.mxu0
    %1702 = vmatprep.subr.mxu0 0.0
    %v1703 = vand.u32 %v1296, 4294901760
    %1704 = vmatpush1.msra.mxu0 %v1703
    %1705 = vmatprep.subr.mxu0 0.0
    %v1706 = vand.u32 %v1297, 4294901760
    %1707 = vmatpush1.msra.mxu0 %v1706
    %1708 = vmatprep.subr.mxu0 0.0
    %1709 = vmatpush1.msra.mxu0 0.0
    %1710 = vmatprep.subr.mxu0 0.0
    %1711 = vmatpush1.msra.mxu0 0.0
    %1712 = vmatprep.subr.mxu0 0.0
    %1713 = vmatpush1.msra.mxu0 0.0
    %1714 = vmatprep.subr.mxu0 0.0
    %1715 = vmatpush1.msra.mxu0 0.0
    %1716 = vmatprep.subr.mxu0 0.0
    %1717 = vmatpush1.msra.mxu0 0.0
    %1718 = vmatprep.subr.mxu0 0.0
    %1719 = vmatpush1.msra.mxu0 0.0
    %1720 = vmatprep.subr.mxu0 0.0
    %1721 = vmatpush1.msra.mxu0 0.0
    %1722 = vmatprep.subr.mxu0 0.0
    %1723 = vmatpush1.msra.mxu0 0.0
    %1724 = vmatprep.subr.mxu0 0.0
    %1725 = vmatpush1.msra.mxu0 0.0
    %1726 = vmatprep.subr.mxu0 0.0
    %1727 = vmatpush1.msra.mxu0 0.0
    %1728 = vmatprep.subr.mxu0 0.0
    %1729 = vmatpush1.msra.mxu0 0.0
    %1730 = vmatprep.subr.mxu0 0.0
    %1731 = vmatpush1.msra.mxu0 0.0
    %1732 = vmatprep.subr.mxu0 0.0
    %1733 = vmatpush1.msra.mxu0 0.0
    %1734 = vmatprep.subr.mxu0 0.0
    %1735 = vmatpush1.msra.mxu0 0.0
    %1736 = vmatprep.subr.mxu0 0.0
    %1737 = vmatpush1.msra.mxu0 0.0
    %1738 = vmatprep.subr.mxu0 0.0
    %1739 = vmatpush1.msra.mxu0 0.0
    %1740 = vmatprep.subr.mxu0 0.0
    %1741 = vmatpush1.msra.mxu0 0.0
    %1742 = vmatprep.subr.mxu0 0.0
    %1743 = vmatpush1.msra.mxu0 0.0
    %1744 = vmatprep.subr.mxu0 0.0
    %1745 = vmatpush1.msra.mxu0 0.0
    %1746 = vmatprep.subr.mxu0 0.0
    %1747 = vmatpush1.msra.mxu0 0.0
    %1748 = vmatprep.subr.mxu0 0.0
    %1749 = vmatpush1.msra.mxu0 0.0
    %1750 = vmatprep.subr.mxu0 0.0
    %1751 = vmatpush1.msra.mxu0 0.0
    %1752 = vmatprep.subr.mxu0 0.0
    %1753 = vmatpush1.msra.mxu0 0.0
    %1754 = vmatprep.subr.mxu0 0.0
    %1755 = vmatpush1.msra.mxu0 0.0
    %1756 = vmatprep.subr.mxu0 0.0
    %1757 = vmatpush1.msra.mxu0 0.0
    %1758 = vmatprep.subr.mxu0 0.0
    %1759 = vmatpush1.msra.mxu0 0.0
    %1760 = vmatprep.subr.mxu0 0.0
    %1761 = vmatpush1.msra.mxu0 0.0
    %1762 = vmatprep.subr.mxu0 0.0
    %1763 = vmatpush1.msra.mxu0 0.0
    %1764 = vmatprep.subr.mxu0 0.0
    %1765 = vmatpush1.msra.mxu0 0.0
    %1766 = vmatprep.subr.mxu0 0.0
    %1767 = vmatpush1.msra.mxu0 0.0
    %1768 = vmatprep.mubr.f32.mxu0 0.0
    %v1769 = vand.u32 %v1314, 4294901760
    %1770 = vmatmul.mubr.f32.gmra.mrb[0].mxu0 %v1769
    %v1771 = vpop.f32.mrb[0].mxu0
    %v1772 = vadd.f32 %v1699, %v1771
    %v1773 = vpop.f32.mrb[0].mxu0
    %1774 = vdwg.mxu0
    %1775 = vst [vmem:[#allocation7] sm:$0xff] %v753
    %1776 = vst [vmem:[#allocation7 + $0x8] sm:$0xff] %v1772
    // Predicated region
    $region18: #{tpu_custom_call.1} parent=1 // pred_check
      _
    $region19: #{tpu_custom_call.1} parent=1 // pred_check_branch
      %1778 = sbr.rel (0) target = $region21
    $region20: #{tpu_custom_call.1} parent=1 // pred_region
      %s1780 = ssub.s32 256, 256
      %1781 = vsyncadd [#allocation4], %s1780
      %s1782 = sshll.u32 [#allocation7], 4
      %s1783 = int_to_ptr.vmem [resolvable:$true] %s1782
      %1788 = dma.vmem_to_hbm [thread:$0]  %s1783, 256, %s2, [#allocation4], 128, 128, 8
    $region21: #{tpu_custom_call.1} parent=1 // pred_fallthru
      _
    // Predicated region
    $region22: #{tpu_custom_call.1} parent=1 // pred_check
      _
    $region23: #{tpu_custom_call.1} parent=1 // pred_check_branch
      %1790 = sbr.rel (0) target = $region25
    $region24: #{tpu_custom_call.1} parent=1 // pred_region
      %1791 = dma.done [#allocation4], 256
    $region25: #{tpu_custom_call.1} parent=1 // pred_fallthru
      _
    %1792 = vsyncpa [#allocation3], 1
    %1793 = vsyncpa [#allocation6], 1
    %1794 = vsyncpa [#allocation4], 1

</llo_original>
